<compile_context>
chip_gen: v7x
topology: tpu7x:2x2x1
jax: 0.10.0
libtpu: 0.0.40
codegen_flags: <defaults>
</compile_context>

<pallas_src>
import functools

import jax
import jax.numpy as jnp
from jax.experimental import pallas as pl
from jax.experimental.pallas import tpu as pltpu

IN_DIM = 28 * 28        # 784
IN_PAD = 896            # 7 * 128 : lane-aligned padded K for fc1
HID = 512
OUT_DIM = 10
OUT_PAD = 128           # lane-dense padded output width
NEG_INF = -1e30
VMEM_LIMIT_BYTES = 32 * 1024 * 1024   # actual use ~7 MB at block_b=256


def _round_up(n, m):
    return ((n + m - 1) // m) * m


def _pick_block_b(batch, requested):
    """Batch tile: MXU-friendly, sublane(8)-aligned, >=2 grid steps when possible."""
    bb = min(requested, _round_up(batch, 8))
    # If the whole (padded) batch fits in one tile but is big enough to split,
    # use two grid steps so v7x's two TensorCores both get work.
    if batch >= 16 and _round_up(batch, bb) // bb < 2:
        bb = _round_up((batch + 1) // 2, 8)
    return bb


def _mlp_kernel(x_ref, w1_ref, b1_ref, w2_ref, b2_ref, w3_ref, b3_ref, out_ref):
    # fc1 + relu  (bf16 operands, f32 accumulation / elementwise)
    h1 = jnp.dot(x_ref[...], w1_ref[...],
                 preferred_element_type=jnp.float32) + b1_ref[...]
    h1 = jnp.maximum(h1, 0.0)
    # dropout1: identity (eval mode)
    # fc2 + relu
    h2 = jnp.dot(h1.astype(jnp.bfloat16), w2_ref[...],
                 preferred_element_type=jnp.float32) + b2_ref[...]
    h2 = jnp.maximum(h2, 0.0)
    # dropout2: identity (eval mode)
    # fc3 (padded to 128 lanes; pad biases are -1e30 so they vanish in softmax)
    logits = jnp.dot(h2.astype(jnp.bfloat16), w3_ref[...],
                     preferred_element_type=jnp.float32) + b3_ref[...]
    # numerically-stable log_softmax over last dim (f32)
    m = jnp.max(logits, axis=-1, keepdims=True)
    s = logits - m
    lse = jnp.log(jnp.sum(jnp.exp(s), axis=-1, keepdims=True))
    out_ref[...] = s - lse


@functools.partial(jax.jit, static_argnames=("block_b",))
def linear_mnist_forward(x_nchw, params, block_b=256):
    w1p, b1, w2, b2, w3p, b3p = params
    B = x_nchw.shape[0]

    bb = _pick_block_b(B, block_b)
    padded_B = _round_up(B, bb)
    grid = (padded_B // bb,)

    # == torch x.view(-1, 784); cast to bf16 and zero-pad batch rows + K cols.
    x = x_nchw.reshape(B, IN_DIM).astype(jnp.bfloat16)
    x = jnp.pad(x, ((0, padded_B - B), (0, IN_PAD - IN_DIM)))

    flops = 2 * padded_B * (IN_PAD * HID + HID * HID + HID * OUT_PAD)
    bytes_accessed = (
        x.size * 2                                    # bf16 input
        + (w1p.size + w2.size + w3p.size) * 2         # bf16 weights
        + (b1.size + b2.size + b3p.size) * 4          # f32 biases
        + padded_B * OUT_PAD * 4                      # f32 output
    )
    cost = pl.CostEstimate(flops=flops,
                           transcendentals=padded_B * OUT_PAD,
                           bytes_accessed=bytes_accessed)

    out_padded = pl.pallas_call(
        _mlp_kernel,
        out_shape=jax.ShapeDtypeStruct((padded_B, OUT_PAD), jnp.float32),
        grid_spec=pltpu.PrefetchScalarGridSpec(
            num_scalar_prefetch=0,
            grid=grid,
            in_specs=[
                pl.BlockSpec((bb, IN_PAD), lambda i: (i, 0)),      # x tile
                pl.BlockSpec((IN_PAD, HID), lambda i: (0, 0)),     # W1 (resident)
                pl.BlockSpec((1, HID), lambda i: (0, 0)),          # b1
                pl.BlockSpec((HID, HID), lambda i: (0, 0)),        # W2 (resident)
                pl.BlockSpec((1, HID), lambda i: (0, 0)),          # b2
                pl.BlockSpec((HID, OUT_PAD), lambda i: (0, 0)),    # W3 (padded)
                pl.BlockSpec((1, OUT_PAD), lambda i: (0, 0)),      # b3 (padded)
            ],
            out_specs=pl.BlockSpec((bb, OUT_PAD), lambda i: (i, 0)),
        ),
        compiler_params=pltpu.CompilerParams(
            dimension_semantics=("parallel",),
            vmem_limit_bytes=VMEM_LIMIT_BYTES,
        ),
        cost_estimate=cost,
    )(x, w1p, b1, w2, b2, w3p, b3p)

    return out_padded[:B, :OUT_DIM]


def init_params(key):
    """Deterministic init mimicking nn.Linear default (U(-1/sqrt(fan_in), +))."""
    k = jax.random.split(key, 6)

    def lin(kw, kb, fan_in, fan_out):
        bound = 1.0 / jnp.sqrt(float(fan_in))
        w = jax.random.uniform(kw, (fan_in, fan_out), jnp.float32, -bound, bound)
        b = jax.random.uniform(kb, (1, fan_out), jnp.float32, -bound, bound)
        return w, b

    w1, b1 = lin(k[0], k[1], IN_DIM, HID)
    w2, b2 = lin(k[2], k[3], HID, HID)
    w3, b3 = lin(k[4], k[5], HID, OUT_DIM)

    # Pad fc1 K: 784 -> 896 with zero rows (matches zero-padded x columns).
    w1p = jnp.zeros((IN_PAD, HID), jnp.float32).at[:IN_DIM, :].set(w1)
    # Pad fc3 to 128 output lanes: zero weights, -1e30 bias for padded columns.
    w3p = jnp.zeros((HID, OUT_PAD), jnp.float32).at[:, :OUT_DIM].set(w3)
    b3p = jnp.full((1, OUT_PAD), NEG_INF, jnp.float32).at[:, :OUT_DIM].set(b3)

    # Weights are bf16 MXU operands; biases stay f32.
    return (w1p.astype(jnp.bfloat16), b1,
            w2.astype(jnp.bfloat16), b2,
            w3p.astype(jnp.bfloat16), b3p)


def reference_forward(x_nchw, params):
    """Pure-JAX reference of the PyTorch forward (eval mode, same bf16 operands)."""
    w1p, b1, w2, b2, w3p, b3p = params
    B = x_nchw.shape[0]
    x = x_nchw.reshape(B, IN_DIM).astype(jnp.bfloat16)
    x = jnp.pad(x, ((0, 0), (0, IN_PAD - IN_DIM)))
    h1 = jnp.maximum(jnp.dot(x, w1p, preferred_element_type=jnp.float32) + b1, 0.0)
    h2 = jnp.maximum(
        jnp.dot(h1.astype(jnp.bfloat16), w2, preferred_element_type=jnp.float32) + b2,
        0.0)
    logits = jnp.dot(h2.astype(jnp.bfloat16), w3p,
                     preferred_element_type=jnp.float32) + b3p
    return jax.nn.log_softmax(logits[:, :OUT_DIM], axis=1)


if __name__ == "__main__":
    key = jax.random.PRNGKey(0)
    kp, kx = jax.random.split(key)
    params = init_params(kp)

    # Small MNIST-shaped batch; deliberately NOT a multiple of the tile so the
    # pad-to-multiple + slice-back path and a 2-step grid are exercised.
    B = 20
    x = jax.random.normal(kx, (B, 1, 28, 28), jnp.float32)

    out = linear_mnist_forward(x, params)
    out = jax.block_until_ready(out)

    ref = reference_forward(x, params)
    assert out.shape == (B, OUT_DIM)
    assert jnp.allclose(out, ref, atol=2e-3, rtol=2e-3), "mismatch vs reference"
    # log_softmax rows should sum (in prob space) to ~1
    assert jnp.allclose(jnp.sum(jnp.exp(out), axis=1), 1.0, atol=1e-3)

    print("KERNEL_OK")
</pallas_src>

<mosaic_0001>
module attributes {stable_mosaic.version = 11 : i64} {
  func.func @_mlp_kernel(%arg0: i32, %arg1: memref<16x896xbf16, #tpu.memory_space<vmem>>, %arg2: memref<896x512xbf16, #tpu.memory_space<vmem>>, %arg3: memref<1x512xf32, #tpu.memory_space<vmem>>, %arg4: memref<512x512xbf16, #tpu.memory_space<vmem>>, %arg5: memref<1x512xf32, #tpu.memory_space<vmem>>, %arg6: memref<512x128xbf16, #tpu.memory_space<vmem>>, %arg7: memref<1x128xf32, #tpu.memory_space<vmem>>, %arg8: memref<16x128xf32, #tpu.memory_space<vmem>>) attributes {dimension_semantics = [#tpu.dimension_semantics<parallel>], iteration_bounds = array<i64: 2>, scalar_prefetch = 0 : i64, scratch_operands = 0 : i64, tpu.core_type = #tpu.core_type<tc>, window_params = [{transform_indices = @transform_0, window_bounds = array<i64: 16, 896>}, {pipeline_mode = #tpu.pipeline_mode<synchronous>, transform_indices = @transform_1, window_bounds = array<i64: 896, 512>}, {pipeline_mode = #tpu.pipeline_mode<synchronous>, transform_indices = @transform_2, window_bounds = array<i64: 1, 512>}, {pipeline_mode = #tpu.pipeline_mode<synchronous>, transform_indices = @transform_3, window_bounds = array<i64: 512, 512>}, {pipeline_mode = #tpu.pipeline_mode<synchronous>, transform_indices = @transform_4, window_bounds = array<i64: 1, 512>}, {pipeline_mode = #tpu.pipeline_mode<synchronous>, transform_indices = @transform_5, window_bounds = array<i64: 512, 128>}, {pipeline_mode = #tpu.pipeline_mode<synchronous>, transform_indices = @transform_6, window_bounds = array<i64: 1, 128>}, {transform_indices = @transform_7, window_bounds = array<i64: 16, 128>}]} {
    %c0 = arith.constant 0 : index
    %c0_0 = arith.constant 0 : index
    %0 = vector.load %arg1[%c0, %c0_0] : memref<16x896xbf16, #tpu.memory_space<vmem>>, vector<16x896xbf16>
    %c0_1 = arith.constant 0 : index
    %c0_2 = arith.constant 0 : index
    %1 = vector.load %arg2[%c0_1, %c0_2] : memref<896x512xbf16, #tpu.memory_space<vmem>>, vector<896x512xbf16>
    %cst = arith.constant dense<0.000000e+00> : vector<16x512xf32>
    %2 = tpu.matmul %0, %1, %cst {dimension_numbers = #tpu.dot_dimension_numbers<[1], [0], [0], [1], [0, 0, 1, 1], [], []>} : vector<16x896xbf16>, vector<896x512xbf16>, vector<16x512xf32> -> vector<16x512xf32>
    %c0_3 = arith.constant 0 : index
    %c0_4 = arith.constant 0 : index
    %3 = vector.load %arg3[%c0_3, %c0_4] : memref<1x512xf32, #tpu.memory_space<vmem>>, vector<1x512xf32>
    %4 = vector.broadcast %3 : vector<1x512xf32> to vector<16x512xf32>
    %5 = arith.addf %2, %4 : vector<16x512xf32>
    %cst_5 = arith.constant 0.000000e+00 : f32
    %6 = vector.broadcast %cst_5 : f32 to vector<16x512xf32>
    %7 = arith.maximumf %5, %6 : vector<16x512xf32>
    %8 = arith.truncf %7 : vector<16x512xf32> to vector<16x512xbf16>
    %c0_6 = arith.constant 0 : index
    %c0_7 = arith.constant 0 : index
    %9 = vector.load %arg4[%c0_6, %c0_7] : memref<512x512xbf16, #tpu.memory_space<vmem>>, vector<512x512xbf16>
    %cst_8 = arith.constant dense<0.000000e+00> : vector<16x512xf32>
    %10 = tpu.matmul %8, %9, %cst_8 {dimension_numbers = #tpu.dot_dimension_numbers<[1], [0], [0], [1], [0, 0, 1, 1], [], []>} : vector<16x512xbf16>, vector<512x512xbf16>, vector<16x512xf32> -> vector<16x512xf32>
    %c0_9 = arith.constant 0 : index
    %c0_10 = arith.constant 0 : index
    %11 = vector.load %arg5[%c0_9, %c0_10] : memref<1x512xf32, #tpu.memory_space<vmem>>, vector<1x512xf32>
    %12 = vector.broadcast %11 : vector<1x512xf32> to vector<16x512xf32>
    %13 = arith.addf %10, %12 : vector<16x512xf32>
    %cst_11 = arith.constant 0.000000e+00 : f32
    %14 = vector.broadcast %cst_11 : f32 to vector<16x512xf32>
    %15 = arith.maximumf %13, %14 : vector<16x512xf32>
    %16 = arith.truncf %15 : vector<16x512xf32> to vector<16x512xbf16>
    %c0_12 = arith.constant 0 : index
    %c0_13 = arith.constant 0 : index
    %17 = vector.load %arg6[%c0_12, %c0_13] : memref<512x128xbf16, #tpu.memory_space<vmem>>, vector<512x128xbf16>
    %cst_14 = arith.constant dense<0.000000e+00> : vector<16x128xf32>
    %18 = tpu.matmul %16, %17, %cst_14 {dimension_numbers = #tpu.dot_dimension_numbers<[1], [0], [0], [1], [0, 0, 1, 1], [], []>} : vector<16x512xbf16>, vector<512x128xbf16>, vector<16x128xf32> -> vector<16x128xf32>
    %c0_15 = arith.constant 0 : index
    %c0_16 = arith.constant 0 : index
    %19 = vector.load %arg7[%c0_15, %c0_16] : memref<1x128xf32, #tpu.memory_space<vmem>>, vector<1x128xf32>
    %20 = vector.broadcast %19 : vector<1x128xf32> to vector<16x128xf32>
    %21 = arith.addf %18, %20 : vector<16x128xf32>
    %cst_17 = arith.constant dense<0xFF800000> : vector<16xf32>
    %22 = vector.multi_reduction <maximumf>, %21, %cst_17 [1] : vector<16x128xf32> to vector<16xf32>
    %23 = vector.shape_cast %22 : vector<16xf32> to vector<16x1xf32>
    %24 = vector.broadcast %23 : vector<16x1xf32> to vector<16x128xf32>
    %25 = arith.subf %21, %24 : vector<16x128xf32>
    %26 = math.exp %25 : vector<16x128xf32>
    %cst_18 = arith.constant dense<0.000000e+00> : vector<16xf32>
    %27 = vector.multi_reduction <add>, %26, %cst_18 [1] : vector<16x128xf32> to vector<16xf32>
    %28 = vector.shape_cast %27 : vector<16xf32> to vector<16x1xf32>
    %29 = math.log %28 : vector<16x1xf32>
    %30 = vector.broadcast %29 : vector<16x1xf32> to vector<16x128xf32>
    %31 = arith.subf %25, %30 : vector<16x128xf32>
    %c0_19 = arith.constant 0 : index
    %c0_20 = arith.constant 0 : index
    %32 = vector.load %arg8[%c0_19, %c0_20] : memref<16x128xf32, #tpu.memory_space<vmem>>, vector<16x128xf32>
    tpu.vector_store %arg8[%c0_19, %c0_20], %31 {strides = array<i32>} : memref<16x128xf32, #tpu.memory_space<vmem>>, vector<16x128xf32>,
    return
  }
  func.func @transform_0(%arg0: i32) -> (i32, i32) {
    %c0_i32 = arith.constant 0 : i32
    %c0_i32_0 = arith.constant 0 : i32
    return %arg0, %c0_i32 : i32, i32
  }
  func.func @transform_1(%arg0: i32) -> (i32, i32) {
    %c0_i32 = arith.constant 0 : i32
    %c0_i32_0 = arith.constant 0 : i32
    %c0_i32_1 = arith.constant 0 : i32
    return %c0_i32, %c0_i32_0 : i32, i32
  }
  func.func @transform_2(%arg0: i32) -> (i32, i32) {
    %c0_i32 = arith.constant 0 : i32
    %c0_i32_0 = arith.constant 0 : i32
    %c0_i32_1 = arith.constant 0 : i32
    return %c0_i32, %c0_i32_0 : i32, i32
  }
  func.func @transform_3(%arg0: i32) -> (i32, i32) {
    %c0_i32 = arith.constant 0 : i32
    %c0_i32_0 = arith.constant 0 : i32
    %c0_i32_1 = arith.constant 0 : i32
    return %c0_i32, %c0_i32_0 : i32, i32
  }
  func.func @transform_4(%arg0: i32) -> (i32, i32) {
    %c0_i32 = arith.constant 0 : i32
    %c0_i32_0 = arith.constant 0 : i32
    %c0_i32_1 = arith.constant 0 : i32
    return %c0_i32, %c0_i32_0 : i32, i32
  }
  func.func @transform_5(%arg0: i32) -> (i32, i32) {
    %c0_i32 = arith.constant 0 : i32
    %c0_i32_0 = arith.constant 0 : i32
    %c0_i32_1 = arith.constant 0 : i32
    return %c0_i32, %c0_i32_0 : i32, i32
  }
  func.func @transform_6(%arg0: i32) -> (i32, i32) {
    %c0_i32 = arith.constant 0 : i32
    %c0_i32_0 = arith.constant 0 : i32
    %c0_i32_1 = arith.constant 0 : i32
    return %c0_i32, %c0_i32_0 : i32, i32
  }
  func.func @transform_7(%arg0: i32) -> (i32, i32) {
    %c0_i32 = arith.constant 0 : i32
    %c0_i32_0 = arith.constant 0 : i32
    return %arg0, %c0_i32 : i32, i32
  }
}

</mosaic_0001>

<llo_original>
// kernel: linear_mnist_forward.1
$region0: #{linear_mnist_forward.1}
  #allocation0 [shape = 'u32[]', space=smem, size = 0x4, offset = 0x4, fixed_abs, tag = 'smem constant byte address 0x4 - core index']
  #allocation1 [shape = 'u32[144,128]{1,0:T(1,128)}', space=vmem, size = 0x12000, scoped, tag = 'internal scratch']
  %s0 = inlined_call_operand.vmem [shape: bf16[32,896], index: 0, kind: input, shape index: {}]
  %s1 = inlined_call_operand.hbm [shape: bf16[896,512], index: 1, kind: input, shape index: {}]
  %s2 = inlined_call_operand.vmem [shape: f32[1,512], index: 2, kind: input, shape index: {}]
  %s3 = inlined_call_operand.vmem [shape: bf16[512,512], index: 3, kind: input, shape index: {}]
  %s4 = inlined_call_operand.vmem [shape: f32[1,512], index: 4, kind: input, shape index: {}]
  %s5 = inlined_call_operand.vmem [shape: bf16[512,128], index: 5, kind: input, shape index: {}]
  %s6 = inlined_call_operand.vmem [shape: f32[1,128], index: 6, kind: input, shape index: {}]
  %s7 = inlined_call_operand.vmem [shape: f32[32,128], index: 7, kind: output, shape index: {}]
  %s8 = sld [smem:[#allocation0]]
  $region65: #{linear_mnist_forward.1} parent=0
    _
  %s10 = ssub.s32 1, %s8
  %s11 = scalar_select 0, %s10, %s8
  $region1: #{linear_mnist_forward.1} parent=0
    #allocation2 [shape = 'u8[917504]{0}', space=vmem, size = 0xe0000, scoped, tag = 'input window, operand 1, single buffered']
    #allocation3 [shape = 's32[2]{0}', space=sflag, size = 0x8, scoped, tag = 'scoped memory for linear_mnist_forward.1']
    %12 = vsyncpa [#allocation3], 0
    loop: start=0, step=1, limit=4
    $region2: #{linear_mnist_forward.1} parent=1 // loop_pre_header
      _
    $region3: #{linear_mnist_forward.1} parent=1 // loop_header
      %s14 = sphi 0, %s18
      %p15 = scmp.ge.s32.totalorder %s14, 4
      %s24 = sphi 0, %s26
      %s27 = sphi 0, %s24
      %s28 = sphi 0, %s27
      %s44 = sphi 0, %s28
      %s48 = sphi 0, %s48
      %s50 = sphi 0, %s48
      %s51 = sphi 0, %s50
      %s65 = sphi 0, %s51
      %s69 = sphi 0, %s69
      %s71 = sphi 0, %s69
      %s72 = sphi 0, %s71
      %s86 = sphi 0, %s72
      %s90 = sphi 0, %s90
      %s92 = sphi 0, %s90
      %s93 = sphi 0, %s92
      %s107 = sphi 0, %s93
      %s111 = sphi 0, %s111
      %s113 = sphi 0, %s111
      %s114 = sphi 0, %s113
      %s128 = sphi 0, %s114
      %s132 = sphi 0, %s132
      %s134 = sphi 0, %s132
      %s135 = sphi 0, %s134
      %s149 = sphi 0, %s135
      %s153 = sphi 0, %s153
      %s155 = sphi 0, %s153
      %s156 = sphi 0, %s155
      %s170 = sphi 0, %s156
      %s176 = sphi 0, %s178
      %s179 = sphi 0, %s176
      %s180 = sphi 0, %s179
      %s196 = sphi 0, %s180
    $region4: #{linear_mnist_forward.1} parent=1 // loop_header_branch
      %17 = sbr.rel (%p15) target = $region8
    $region5: #{linear_mnist_forward.1} parent=1 // loop_body
      %s19 = ssub.s32 %s14, 1
      %s20 = ssub.s32 %s14, 2
      %s21 = sadd.s32 %s14, 1
      %s22 = ssub.s32 %s14, %s21
      %p23 = scmp.eq.s32.totalorder %s22, 0
      %s25 = sadd.s32 %s24, 1
      %s26 = scalar_select %p23, %s24, %s25
      %p29 = pneg %p23
      %p30 = scmp.eq.s32.totalorder %s14, 1
      %p31 = por %p29, %p30
      %p32 = scmp.ne.s32.totalorder %s24, %s27
      %p33 = scmp.eq.s32.totalorder %s14, 0
      %p34 = por %p32, %p33
      %p35 = scmp.ne.s32.totalorder %s24, %s27
      %p36 = scmp.eq.s32.totalorder %s19, 1
      %p37 = por %p35, %p36
      %p38 = scmp.ne.s32.totalorder %s27, %s28
      %p39 = scmp.eq.s32.totalorder %s19, 0
      %p40 = por %p38, %p39
      %p41 = scmp.ne.s32.totalorder %s27, %s28
      %p42 = scmp.eq.s32.totalorder %s20, 1
      %p43 = por %p41, %p42
      %p45 = scmp.ne.s32.totalorder %s28, %s44
      %p46 = scmp.eq.s32.totalorder %s20, 0
      %p47 = por %p45, %p46
      %s49 = sadd.s32 %s48, 1
      %p52 = scmp.eq.s32.totalorder %s14, 1
      %p53 = scmp.ne.s32.totalorder %s48, %s50
      %p54 = scmp.eq.s32.totalorder %s14, 0
      %p55 = por %p53, %p54
      %p56 = scmp.ne.s32.totalorder %s48, %s50
      %p57 = scmp.eq.s32.totalorder %s19, 1
      %p58 = por %p56, %p57
      %p59 = scmp.ne.s32.totalorder %s50, %s51
      %p60 = scmp.eq.s32.totalorder %s19, 0
      %p61 = por %p59, %p60
      %p62 = scmp.ne.s32.totalorder %s50, %s51
      %p63 = scmp.eq.s32.totalorder %s20, 1
      %p64 = por %p62, %p63
      %p66 = scmp.ne.s32.totalorder %s51, %s65
      %p67 = scmp.eq.s32.totalorder %s20, 0
      %p68 = por %p66, %p67
      %s70 = sadd.s32 %s69, 1
      %p73 = scmp.eq.s32.totalorder %s14, 1
      %p74 = scmp.ne.s32.totalorder %s69, %s71
      %p75 = scmp.eq.s32.totalorder %s14, 0
      %p76 = por %p74, %p75
      %p77 = scmp.ne.s32.totalorder %s69, %s71
      %p78 = scmp.eq.s32.totalorder %s19, 1
      %p79 = por %p77, %p78
      %p80 = scmp.ne.s32.totalorder %s71, %s72
      %p81 = scmp.eq.s32.totalorder %s19, 0
      %p82 = por %p80, %p81
      %p83 = scmp.ne.s32.totalorder %s71, %s72
      %p84 = scmp.eq.s32.totalorder %s20, 1
      %p85 = por %p83, %p84
      %p87 = scmp.ne.s32.totalorder %s72, %s86
      %p88 = scmp.eq.s32.totalorder %s20, 0
      %p89 = por %p87, %p88
      %s91 = sadd.s32 %s90, 1
      %p94 = scmp.eq.s32.totalorder %s14, 1
      %p95 = scmp.ne.s32.totalorder %s90, %s92
      %p96 = scmp.eq.s32.totalorder %s14, 0
      %p97 = por %p95, %p96
      %p98 = scmp.ne.s32.totalorder %s90, %s92
      %p99 = scmp.eq.s32.totalorder %s19, 1
      %p100 = por %p98, %p99
      %p101 = scmp.ne.s32.totalorder %s92, %s93
      %p102 = scmp.eq.s32.totalorder %s19, 0
      %p103 = por %p101, %p102
      %p104 = scmp.ne.s32.totalorder %s92, %s93
      %p105 = scmp.eq.s32.totalorder %s20, 1
      %p106 = por %p104, %p105
      %p108 = scmp.ne.s32.totalorder %s93, %s107
      %p109 = scmp.eq.s32.totalorder %s20, 0
      %p110 = por %p108, %p109
      %s112 = sadd.s32 %s111, 1
      %p115 = scmp.eq.s32.totalorder %s14, 1
      %p116 = scmp.ne.s32.totalorder %s111, %s113
      %p117 = scmp.eq.s32.totalorder %s14, 0
      %p118 = por %p116, %p117
      %p119 = scmp.ne.s32.totalorder %s111, %s113
      %p120 = scmp.eq.s32.totalorder %s19, 1
      %p121 = por %p119, %p120
      %p122 = scmp.ne.s32.totalorder %s113, %s114
      %p123 = scmp.eq.s32.totalorder %s19, 0
      %p124 = por %p122, %p123
      %p125 = scmp.ne.s32.totalorder %s113, %s114
      %p126 = scmp.eq.s32.totalorder %s20, 1
      %p127 = por %p125, %p126
      %p129 = scmp.ne.s32.totalorder %s114, %s128
      %p130 = scmp.eq.s32.totalorder %s20, 0
      %p131 = por %p129, %p130
      %s133 = sadd.s32 %s132, 1
      %p136 = scmp.eq.s32.totalorder %s14, 1
      %p137 = scmp.ne.s32.totalorder %s132, %s134
      %p138 = scmp.eq.s32.totalorder %s14, 0
      %p139 = por %p137, %p138
      %p140 = scmp.ne.s32.totalorder %s132, %s134
      %p141 = scmp.eq.s32.totalorder %s19, 1
      %p142 = por %p140, %p141
      %p143 = scmp.ne.s32.totalorder %s134, %s135
      %p144 = scmp.eq.s32.totalorder %s19, 0
      %p145 = por %p143, %p144
      %p146 = scmp.ne.s32.totalorder %s134, %s135
      %p147 = scmp.eq.s32.totalorder %s20, 1
      %p148 = por %p146, %p147
      %p150 = scmp.ne.s32.totalorder %s135, %s149
      %p151 = scmp.eq.s32.totalorder %s20, 0
      %p152 = por %p150, %p151
      %s154 = sadd.s32 %s153, 1
      %p157 = scmp.eq.s32.totalorder %s14, 1
      %p158 = scmp.ne.s32.totalorder %s153, %s155
      %p159 = scmp.eq.s32.totalorder %s14, 0
      %p160 = por %p158, %p159
      %p161 = scmp.ne.s32.totalorder %s153, %s155
      %p162 = scmp.eq.s32.totalorder %s19, 1
      %p163 = por %p161, %p162
      %p164 = scmp.ne.s32.totalorder %s155, %s156
      %p165 = scmp.eq.s32.totalorder %s19, 0
      %p166 = por %p164, %p165
      %p167 = scmp.ne.s32.totalorder %s155, %s156
      %p168 = scmp.eq.s32.totalorder %s20, 1
      %p169 = por %p167, %p168
      %p171 = scmp.ne.s32.totalorder %s156, %s170
      %p172 = scmp.eq.s32.totalorder %s20, 0
      %p173 = por %p171, %p172
      %s174 = ssub.s32 %s14, %s21
      %p175 = scmp.eq.s32.totalorder %s174, 0
      %s177 = sadd.s32 %s176, 1
      %s178 = scalar_select %p175, %s176, %s177
      %p181 = pneg %p175
      %p182 = scmp.eq.s32.totalorder %s14, 1
      %p183 = por %p181, %p182
      %p184 = scmp.ne.s32.totalorder %s176, %s179
      %p185 = scmp.eq.s32.totalorder %s14, 0
      %p186 = por %p184, %p185
      %p187 = scmp.ne.s32.totalorder %s176, %s179
      %p188 = scmp.eq.s32.totalorder %s19, 1
      %p189 = por %p187, %p188
      %p190 = scmp.ne.s32.totalorder %s179, %s180
      %p191 = scmp.eq.s32.totalorder %s19, 0
      %p192 = por %p190, %p191
      %p193 = scmp.ne.s32.totalorder %s179, %s180
      %p194 = scmp.eq.s32.totalorder %s20, 1
      %p195 = por %p193, %p194
      %p197 = scmp.ne.s32.totalorder %s180, %s196
      %p198 = scmp.eq.s32.totalorder %s20, 0
      %p199 = por %p197, %p198
      %p200 = scmp.le.s32.totalorder 1, %s14
      %p201 = scmp.lt.s32.totalorder %s14, 3
      %p202 = pnand %p200, %p201
      %p203 = pneg %p202
      // Predicated region
      $region9: #{linear_mnist_forward.1} parent=5 // pred_check
        _
      $region10: #{linear_mnist_forward.1} parent=5 // pred_check_branch
        %205 = sbr.rel (%p202) target = $region12
      $region11: #{linear_mnist_forward.1} parent=5 // pred_region
        %s206 = ssub.s32 %s14, 1
        // Predicated region
        $region13: #{linear_mnist_forward.1} parent=11 // pred_check
          %p207 = pneg %p61
        $region14: #{linear_mnist_forward.1} parent=11 // pred_check_branch
          %209 = sbr.rel (%p207) target = $region16
        $region15: #{linear_mnist_forward.1} parent=11 // pred_region
          %s211 = ssub.s32 28672, 28672
          %212 = vsyncadd [#allocation3], %s211
          %s213 = sshll.u32 [#allocation2], 4
          %s214 = int_to_ptr.vmem [resolvable:$true] %s213
          %219 = dma.hbm_to_vmem [thread:$0]  %s1, 28672, %s214, [#allocation3], 256, 256, 16
        $region16: #{linear_mnist_forward.1} parent=11 // pred_fallthru
          _
        // Predicated region
        $region17: #{linear_mnist_forward.1} parent=11 // pred_check
          %p220 = pneg %p82
        $region18: #{linear_mnist_forward.1} parent=11 // pred_check_branch
          %222 = sbr.rel (%p220) target = $region20
        $region19: #{linear_mnist_forward.1} parent=11 // pred_region
          _
        $region20: #{linear_mnist_forward.1} parent=11 // pred_fallthru
          _
        // Predicated region
        $region21: #{linear_mnist_forward.1} parent=11 // pred_check
          %p223 = pneg %p103
        $region22: #{linear_mnist_forward.1} parent=11 // pred_check_branch
          %225 = sbr.rel (%p223) target = $region24
        $region23: #{linear_mnist_forward.1} parent=11 // pred_region
          _
        $region24: #{linear_mnist_forward.1} parent=11 // pred_fallthru
          _
        // Predicated region
        $region25: #{linear_mnist_forward.1} parent=11 // pred_check
          %p226 = pneg %p124
        $region26: #{linear_mnist_forward.1} parent=11 // pred_check_branch
          %228 = sbr.rel (%p226) target = $region28
        $region27: #{linear_mnist_forward.1} parent=11 // pred_region
          _
        $region28: #{linear_mnist_forward.1} parent=11 // pred_fallthru
          _
        // Predicated region
        $region29: #{linear_mnist_forward.1} parent=11 // pred_check
          %p229 = pneg %p145
        $region30: #{linear_mnist_forward.1} parent=11 // pred_check_branch
          %231 = sbr.rel (%p229) target = $region32
        $region31: #{linear_mnist_forward.1} parent=11 // pred_region
          _
        $region32: #{linear_mnist_forward.1} parent=11 // pred_fallthru
          _
        // Predicated region
        $region33: #{linear_mnist_forward.1} parent=11 // pred_check
          %p232 = pneg %p166
        $region34: #{linear_mnist_forward.1} parent=11 // pred_check_branch
          %234 = sbr.rel (%p232) target = $region36
        $region35: #{linear_mnist_forward.1} parent=11 // pred_region
          _
        $region36: #{linear_mnist_forward.1} parent=11 // pred_fallthru
          _
      $region12: #{linear_mnist_forward.1} parent=5 // pred_fallthru
        _
      %p235 = scmp.lt.s32.totalorder %s14, 2
      // Predicated region
      $region37: #{linear_mnist_forward.1} parent=5 // pred_check
        %p236 = pneg %p235
      $region38: #{linear_mnist_forward.1} parent=5 // pred_check_branch
        %238 = sbr.rel (%p236) target = $region40
      $region39: #{linear_mnist_forward.1} parent=5 // pred_region
        // Predicated region
        $region41: #{linear_mnist_forward.1} parent=39 // pred_check
          %p239 = pneg %p34
        $region42: #{linear_mnist_forward.1} parent=39 // pred_check_branch
          %241 = sbr.rel (%p239) target = $region44
        $region43: #{linear_mnist_forward.1} parent=39 // pred_region
          %s242 = smul.u32 2, %s14
          %p243 = scmp.lt.s32.totalorder %s242, 3
          %s244 = scalar_select %p243, %s242, 3
          %s245 = smul.addr %s244, 7
          %s246 = smul.addr %s245, 4
          %s247 = scalar_lea.vmem %s0, %s246
          %s248 = smul.u32 2, %s14
        $region44: #{linear_mnist_forward.1} parent=39 // pred_fallthru
          _
      $region40: #{linear_mnist_forward.1} parent=5 // pred_fallthru
        _
      %p249 = scmp.le.s32.totalorder 1, %s14
      %p250 = scmp.lt.s32.totalorder %s14, 3
      %p251 = pnand %p249, %p250
      %p252 = pneg %p251
      // Predicated region
      $region45: #{linear_mnist_forward.1} parent=5 // pred_check
        _
      $region46: #{linear_mnist_forward.1} parent=5 // pred_check_branch
        %254 = sbr.rel (%p251) target = $region48
      $region47: #{linear_mnist_forward.1} parent=5 // pred_region
        %s255 = ssub.s32 %s14, 1
        // Predicated region
        $region49: #{linear_mnist_forward.1} parent=47 // pred_check
          %p256 = pneg %p61
        $region50: #{linear_mnist_forward.1} parent=47 // pred_check_branch
          %258 = sbr.rel (%p256) target = $region52
        $region51: #{linear_mnist_forward.1} parent=47 // pred_region
          %259 = dma.done [#allocation3], 28672
        $region52: #{linear_mnist_forward.1} parent=47 // pred_fallthru
          _
        %s260 = smul.u32 2, %s19
        %p261 = scmp.lt.s32.totalorder %s260, 3
        %s262 = scalar_select %p261, %s260, 3
        %s263 = smul.addr %s262, 7
        %s264 = smul.addr %s263, 4
        %s265 = scalar_lea.vmem %s0, %s264
        %p266 = pneg %p40
        %p267 = pneg %p37
        %p268 = pneg %p61
        %p269 = pneg %p58
        %p270 = pneg %p82
        %p271 = pneg %p79
        %p272 = pneg %p103
        %p273 = pneg %p100
        %p274 = pneg %p124
        %p275 = pneg %p121
        %p276 = pneg %p145
        %p277 = pneg %p142
        %p278 = pneg %p166
        %p279 = pneg %p163
        %p280 = pneg %p192
        %p281 = pneg %p189
        %s282 = smul.u32 2, %s19
        %p283 = scmp.lt.s32.totalorder %s282, 3
        %s284 = scalar_select %p283, %s282, 3
        %s285 = smul.addr %s284, 8
        %s286 = scalar_lea.vmem %s7, %s285
        %s287 = smul.u32 2, %s19
        %p288 = scmp.lt.s32.totalorder %s287, 3
        %s289 = scalar_select %p288, %s287, 3
        %s290 = smul.addr %s289, 7
        %s291 = smul.addr %s290, 4
        %s292 = scalar_lea.vmem %s0, %s291
        %s293 = smul.u32 2, %s19
        %s294 = smul.u32 2, %s19
        %p295 = scmp.lt.s32.totalorder %s294, 3
        %s296 = scalar_select %p295, %s294, 3
        %s297 = smul.addr %s296, 8
        %s298 = scalar_lea.vmem %s7, %s297
        %s299 = smul.u32 2, %s19
        %v301 = vld [vmem:[%s292] sm:$0xff]
        %v302 = vld [vmem:[%s292 + $0x8] sm:$0xff]
        %v303 = vld [vmem:[%s292 + $0x10] sm:$0xff]
        %v304 = vld [vmem:[%s292 + $0x18] sm:$0xf]
        %v305 = vld [vmem:[%s292 + $0x1c] sm:$0xff]
        %v306 = vld [vmem:[%s292 + $0x24] sm:$0xff]
        %v307 = vld [vmem:[%s292 + $0x2c] sm:$0xff]
        %v308 = vld [vmem:[%s292 + $0x34] sm:$0xf]
        %v309 = vld [vmem:[#allocation2] sm:$0xff]
        %v310 = vld [vmem:[#allocation2 + $0x8] sm:$0xff]
        %v311 = vld [vmem:[#allocation2 + $0x10] sm:$0xff]
        %v312 = vld [vmem:[#allocation2 + $0x18] sm:$0xff]
        %v313 = vld [vmem:[#allocation2 + $0x20] sm:$0xff]
        %v314 = vld [vmem:[#allocation2 + $0x28] sm:$0xff]
        %v315 = vld [vmem:[#allocation2 + $0x30] sm:$0xff]
        %v316 = vld [vmem:[#allocation2 + $0x38] sm:$0xff]
        %v317 = vld [vmem:[#allocation2 + $0x40] sm:$0xff]
        %v318 = vld [vmem:[#allocation2 + $0x48] sm:$0xff]
        %v319 = vld [vmem:[#allocation2 + $0x50] sm:$0xff]
        %v320 = vld [vmem:[#allocation2 + $0x58] sm:$0xff]
        %v321 = vld [vmem:[#allocation2 + $0x60] sm:$0xff]
        %v322 = vld [vmem:[#allocation2 + $0x68] sm:$0xff]
        %v323 = vld [vmem:[#allocation2 + $0x70] sm:$0xff]
        %v324 = vld [vmem:[#allocation2 + $0x78] sm:$0xff]
        %v325 = vld [vmem:[#allocation2 + $0x80] sm:$0xff]
        %v326 = vld [vmem:[#allocation2 + $0x88] sm:$0xff]
        %v327 = vld [vmem:[#allocation2 + $0x90] sm:$0xff]
        %v328 = vld [vmem:[#allocation2 + $0x98] sm:$0xff]
        %v329 = vld [vmem:[#allocation2 + $0xa0] sm:$0xff]
        %v330 = vld [vmem:[#allocation2 + $0xa8] sm:$0xff]
        %v331 = vld [vmem:[#allocation2 + $0xb0] sm:$0xff]
        %v332 = vld [vmem:[#allocation2 + $0xb8] sm:$0xff]
        %v333 = vld [vmem:[#allocation2 + $0xc0] sm:$0xff]
        %v334 = vld [vmem:[#allocation2 + $0xc8] sm:$0xff]
        %v335 = vld [vmem:[#allocation2 + $0xd0] sm:$0xff]
        %v336 = vld [vmem:[#allocation2 + $0xd8] sm:$0xff]
        %v337 = vld [vmem:[#allocation2 + $0xe0] sm:$0xff]
        %v338 = vld [vmem:[#allocation2 + $0xe8] sm:$0xff]
        %v339 = vld [vmem:[#allocation2 + $0xf0] sm:$0xff]
        %v340 = vld [vmem:[#allocation2 + $0xf8] sm:$0xff]
        %v341 = vld [vmem:[#allocation2 + $0x100] sm:$0xff]
        %v342 = vld [vmem:[#allocation2 + $0x108] sm:$0xff]
        %v343 = vld [vmem:[#allocation2 + $0x110] sm:$0xff]
        %v344 = vld [vmem:[#allocation2 + $0x118] sm:$0xff]
        %v345 = vld [vmem:[#allocation2 + $0x120] sm:$0xff]
        %v346 = vld [vmem:[#allocation2 + $0x128] sm:$0xff]
        %v347 = vld [vmem:[#allocation2 + $0x130] sm:$0xff]
        %v348 = vld [vmem:[#allocation2 + $0x138] sm:$0xff]
        %v349 = vld [vmem:[#allocation2 + $0x140] sm:$0xff]
        %v350 = vld [vmem:[#allocation2 + $0x148] sm:$0xff]
        %v351 = vld [vmem:[#allocation2 + $0x150] sm:$0xff]
        %v352 = vld [vmem:[#allocation2 + $0x158] sm:$0xff]
        %v353 = vld [vmem:[#allocation2 + $0x160] sm:$0xff]
        %v354 = vld [vmem:[#allocation2 + $0x168] sm:$0xff]
        %v355 = vld [vmem:[#allocation2 + $0x170] sm:$0xff]
        %v356 = vld [vmem:[#allocation2 + $0x178] sm:$0xff]
        %v357 = vld [vmem:[#allocation2 + $0x180] sm:$0xff]
        %v358 = vld [vmem:[#allocation2 + $0x188] sm:$0xff]
        %v359 = vld [vmem:[#allocation2 + $0x190] sm:$0xff]
        %v360 = vld [vmem:[#allocation2 + $0x198] sm:$0xff]
        %v361 = vld [vmem:[#allocation2 + $0x1a0] sm:$0xff]
        %v362 = vld [vmem:[#allocation2 + $0x1a8] sm:$0xff]
        %v363 = vld [vmem:[#allocation2 + $0x1b0] sm:$0xff]
        %v364 = vld [vmem:[#allocation2 + $0x1b8] sm:$0xff]
        %v365 = vld [vmem:[#allocation2 + $0x1c0] sm:$0xff]
        %v366 = vld [vmem:[#allocation2 + $0x1c8] sm:$0xff]
        %v367 = vld [vmem:[#allocation2 + $0x1d0] sm:$0xff]
        %v368 = vld [vmem:[#allocation2 + $0x1d8] sm:$0xff]
        %v369 = vld [vmem:[#allocation2 + $0x1e0] sm:$0xff]
        %v370 = vld [vmem:[#allocation2 + $0x1e8] sm:$0xff]
        %v371 = vld [vmem:[#allocation2 + $0x1f0] sm:$0xff]
        %v372 = vld [vmem:[#allocation2 + $0x1f8] sm:$0xff]
        %v373 = vld [vmem:[#allocation2 + $0x200] sm:$0xff]
        %v374 = vld [vmem:[#allocation2 + $0x208] sm:$0xff]
        %v375 = vld [vmem:[#allocation2 + $0x210] sm:$0xff]
        %v376 = vld [vmem:[#allocation2 + $0x218] sm:$0xff]
        %v377 = vld [vmem:[#allocation2 + $0x220] sm:$0xff]
        %v378 = vld [vmem:[#allocation2 + $0x228] sm:$0xff]
        %v379 = vld [vmem:[#allocation2 + $0x230] sm:$0xff]
        %v380 = vld [vmem:[#allocation2 + $0x238] sm:$0xff]
        %v381 = vld [vmem:[#allocation2 + $0x240] sm:$0xff]
        %v382 = vld [vmem:[#allocation2 + $0x248] sm:$0xff]
        %v383 = vld [vmem:[#allocation2 + $0x250] sm:$0xff]
        %v384 = vld [vmem:[#allocation2 + $0x258] sm:$0xff]
        %v385 = vld [vmem:[#allocation2 + $0x260] sm:$0xff]
        %v386 = vld [vmem:[#allocation2 + $0x268] sm:$0xff]
        %v387 = vld [vmem:[#allocation2 + $0x270] sm:$0xff]
        %v388 = vld [vmem:[#allocation2 + $0x278] sm:$0xff]
        %v389 = vld [vmem:[#allocation2 + $0x280] sm:$0xff]
        %v390 = vld [vmem:[#allocation2 + $0x288] sm:$0xff]
        %v391 = vld [vmem:[#allocation2 + $0x290] sm:$0xff]
        %v392 = vld [vmem:[#allocation2 + $0x298] sm:$0xff]
        %v393 = vld [vmem:[#allocation2 + $0x2a0] sm:$0xff]
        %v394 = vld [vmem:[#allocation2 + $0x2a8] sm:$0xff]
        %v395 = vld [vmem:[#allocation2 + $0x2b0] sm:$0xff]
        %v396 = vld [vmem:[#allocation2 + $0x2b8] sm:$0xff]
        %v397 = vld [vmem:[#allocation2 + $0x2c0] sm:$0xff]
        %v398 = vld [vmem:[#allocation2 + $0x2c8] sm:$0xff]
        %v399 = vld [vmem:[#allocation2 + $0x2d0] sm:$0xff]
        %v400 = vld [vmem:[#allocation2 + $0x2d8] sm:$0xff]
        %v401 = vld [vmem:[#allocation2 + $0x2e0] sm:$0xff]
        %v402 = vld [vmem:[#allocation2 + $0x2e8] sm:$0xff]
        %v403 = vld [vmem:[#allocation2 + $0x2f0] sm:$0xff]
        %v404 = vld [vmem:[#allocation2 + $0x2f8] sm:$0xff]
        %v405 = vld [vmem:[#allocation2 + $0x300] sm:$0xff]
        %v406 = vld [vmem:[#allocation2 + $0x308] sm:$0xff]
        %v407 = vld [vmem:[#allocation2 + $0x310] sm:$0xff]
        %v408 = vld [vmem:[#allocation2 + $0x318] sm:$0xff]
        %v409 = vld [vmem:[#allocation2 + $0x320] sm:$0xff]
        %v410 = vld [vmem:[#allocation2 + $0x328] sm:$0xff]
        %v411 = vld [vmem:[#allocation2 + $0x330] sm:$0xff]
        %v412 = vld [vmem:[#allocation2 + $0x338] sm:$0xff]
        %v413 = vld [vmem:[#allocation2 + $0x340] sm:$0xff]
        %v414 = vld [vmem:[#allocation2 + $0x348] sm:$0xff]
        %v415 = vld [vmem:[#allocation2 + $0x350] sm:$0xff]
        %v416 = vld [vmem:[#allocation2 + $0x358] sm:$0xff]
        %v417 = vld [vmem:[#allocation2 + $0x360] sm:$0xff]
        %v418 = vld [vmem:[#allocation2 + $0x368] sm:$0xff]
        %v419 = vld [vmem:[#allocation2 + $0x370] sm:$0xff]
        %v420 = vld [vmem:[#allocation2 + $0x378] sm:$0xff]
        %v421 = vld [vmem:[#allocation2 + $0x380] sm:$0xff]
        %v422 = vld [vmem:[#allocation2 + $0x388] sm:$0xff]
        %v423 = vld [vmem:[#allocation2 + $0x390] sm:$0xff]
        %v424 = vld [vmem:[#allocation2 + $0x398] sm:$0xff]
        %v425 = vld [vmem:[#allocation2 + $0x3a0] sm:$0xff]
        %v426 = vld [vmem:[#allocation2 + $0x3a8] sm:$0xff]
        %v427 = vld [vmem:[#allocation2 + $0x3b0] sm:$0xff]
        %v428 = vld [vmem:[#allocation2 + $0x3b8] sm:$0xff]
        %v429 = vld [vmem:[#allocation2 + $0x3c0] sm:$0xff]
        %v430 = vld [vmem:[#allocation2 + $0x3c8] sm:$0xff]
        %v431 = vld [vmem:[#allocation2 + $0x3d0] sm:$0xff]
        %v432 = vld [vmem:[#allocation2 + $0x3d8] sm:$0xff]
        %v433 = vld [vmem:[#allocation2 + $0x3e0] sm:$0xff]
        %v434 = vld [vmem:[#allocation2 + $0x3e8] sm:$0xff]
        %v435 = vld [vmem:[#allocation2 + $0x3f0] sm:$0xff]
        %v436 = vld [vmem:[#allocation2 + $0x3f8] sm:$0xff]
        %v437 = vld [vmem:[#allocation2 + $0x400] sm:$0xff]
        %v438 = vld [vmem:[#allocation2 + $0x408] sm:$0xff]
        %v439 = vld [vmem:[#allocation2 + $0x410] sm:$0xff]
        %v440 = vld [vmem:[#allocation2 + $0x418] sm:$0xff]
        %v441 = vld [vmem:[#allocation2 + $0x420] sm:$0xff]
        %v442 = vld [vmem:[#allocation2 + $0x428] sm:$0xff]
        %v443 = vld [vmem:[#allocation2 + $0x430] sm:$0xff]
        %v444 = vld [vmem:[#allocation2 + $0x438] sm:$0xff]
        %v445 = vld [vmem:[#allocation2 + $0x440] sm:$0xff]
        %v446 = vld [vmem:[#allocation2 + $0x448] sm:$0xff]
        %v447 = vld [vmem:[#allocation2 + $0x450] sm:$0xff]
        %v448 = vld [vmem:[#allocation2 + $0x458] sm:$0xff]
        %v449 = vld [vmem:[#allocation2 + $0x460] sm:$0xff]
        %v450 = vld [vmem:[#allocation2 + $0x468] sm:$0xff]
        %v451 = vld [vmem:[#allocation2 + $0x470] sm:$0xff]
        %v452 = vld [vmem:[#allocation2 + $0x478] sm:$0xff]
        %v453 = vld [vmem:[#allocation2 + $0x480] sm:$0xff]
        %v454 = vld [vmem:[#allocation2 + $0x488] sm:$0xff]
        %v455 = vld [vmem:[#allocation2 + $0x490] sm:$0xff]
        %v456 = vld [vmem:[#allocation2 + $0x498] sm:$0xff]
        %v457 = vld [vmem:[#allocation2 + $0x4a0] sm:$0xff]
        %v458 = vld [vmem:[#allocation2 + $0x4a8] sm:$0xff]
        %v459 = vld [vmem:[#allocation2 + $0x4b0] sm:$0xff]
        %v460 = vld [vmem:[#allocation2 + $0x4b8] sm:$0xff]
        %v461 = vld [vmem:[#allocation2 + $0x4c0] sm:$0xff]
        %v462 = vld [vmem:[#allocation2 + $0x4c8] sm:$0xff]
        %v463 = vld [vmem:[#allocation2 + $0x4d0] sm:$0xff]
        %v464 = vld [vmem:[#allocation2 + $0x4d8] sm:$0xff]
        %v465 = vld [vmem:[#allocation2 + $0x4e0] sm:$0xff]
        %v466 = vld [vmem:[#allocation2 + $0x4e8] sm:$0xff]
        %v467 = vld [vmem:[#allocation2 + $0x4f0] sm:$0xff]
        %v468 = vld [vmem:[#allocation2 + $0x4f8] sm:$0xff]
        %v469 = vld [vmem:[#allocation2 + $0x500] sm:$0xff]
        %v470 = vld [vmem:[#allocation2 + $0x508] sm:$0xff]
        %v471 = vld [vmem:[#allocation2 + $0x510] sm:$0xff]
        %v472 = vld [vmem:[#allocation2 + $0x518] sm:$0xff]
        %v473 = vld [vmem:[#allocation2 + $0x520] sm:$0xff]
        %v474 = vld [vmem:[#allocation2 + $0x528] sm:$0xff]
        %v475 = vld [vmem:[#allocation2 + $0x530] sm:$0xff]
        %v476 = vld [vmem:[#allocation2 + $0x538] sm:$0xff]
        %v477 = vld [vmem:[#allocation2 + $0x540] sm:$0xff]
        %v478 = vld [vmem:[#allocation2 + $0x548] sm:$0xff]
        %v479 = vld [vmem:[#allocation2 + $0x550] sm:$0xff]
        %v480 = vld [vmem:[#allocation2 + $0x558] sm:$0xff]
        %v481 = vld [vmem:[#allocation2 + $0x560] sm:$0xff]
        %v482 = vld [vmem:[#allocation2 + $0x568] sm:$0xff]
        %v483 = vld [vmem:[#allocation2 + $0x570] sm:$0xff]
        %v484 = vld [vmem:[#allocation2 + $0x578] sm:$0xff]
        %v485 = vld [vmem:[#allocation2 + $0x580] sm:$0xff]
        %v486 = vld [vmem:[#allocation2 + $0x588] sm:$0xff]
        %v487 = vld [vmem:[#allocation2 + $0x590] sm:$0xff]
        %v488 = vld [vmem:[#allocation2 + $0x598] sm:$0xff]
        %v489 = vld [vmem:[#allocation2 + $0x5a0] sm:$0xff]
        %v490 = vld [vmem:[#allocation2 + $0x5a8] sm:$0xff]
        %v491 = vld [vmem:[#allocation2 + $0x5b0] sm:$0xff]
        %v492 = vld [vmem:[#allocation2 + $0x5b8] sm:$0xff]
        %v493 = vld [vmem:[#allocation2 + $0x5c0] sm:$0xff]
        %v494 = vld [vmem:[#allocation2 + $0x5c8] sm:$0xff]
        %v495 = vld [vmem:[#allocation2 + $0x5d0] sm:$0xff]
        %v496 = vld [vmem:[#allocation2 + $0x5d8] sm:$0xff]
        %v497 = vld [vmem:[#allocation2 + $0x5e0] sm:$0xff]
        %v498 = vld [vmem:[#allocation2 + $0x5e8] sm:$0xff]
        %v499 = vld [vmem:[#allocation2 + $0x5f0] sm:$0xff]
        %v500 = vld [vmem:[#allocation2 + $0x5f8] sm:$0xff]
        %v501 = vld [vmem:[#allocation2 + $0x600] sm:$0xff]
        %v502 = vld [vmem:[#allocation2 + $0x608] sm:$0xff]
        %v503 = vld [vmem:[#allocation2 + $0x610] sm:$0xff]
        %v504 = vld [vmem:[#allocation2 + $0x618] sm:$0xff]
        %v505 = vld [vmem:[#allocation2 + $0x620] sm:$0xff]
        %v506 = vld [vmem:[#allocation2 + $0x628] sm:$0xff]
        %v507 = vld [vmem:[#allocation2 + $0x630] sm:$0xff]
        %v508 = vld [vmem:[#allocation2 + $0x638] sm:$0xff]
        %v509 = vld [vmem:[#allocation2 + $0x640] sm:$0xff]
        %v510 = vld [vmem:[#allocation2 + $0x648] sm:$0xff]
        %v511 = vld [vmem:[#allocation2 + $0x650] sm:$0xff]
        %v512 = vld [vmem:[#allocation2 + $0x658] sm:$0xff]
        %v513 = vld [vmem:[#allocation2 + $0x660] sm:$0xff]
        %v514 = vld [vmem:[#allocation2 + $0x668] sm:$0xff]
        %v515 = vld [vmem:[#allocation2 + $0x670] sm:$0xff]
        %v516 = vld [vmem:[#allocation2 + $0x678] sm:$0xff]
        %v517 = vld [vmem:[#allocation2 + $0x680] sm:$0xff]
        %v518 = vld [vmem:[#allocation2 + $0x688] sm:$0xff]
        %v519 = vld [vmem:[#allocation2 + $0x690] sm:$0xff]
        %v520 = vld [vmem:[#allocation2 + $0x698] sm:$0xff]
        %v521 = vld [vmem:[#allocation2 + $0x6a0] sm:$0xff]
        %v522 = vld [vmem:[#allocation2 + $0x6a8] sm:$0xff]
        %v523 = vld [vmem:[#allocation2 + $0x6b0] sm:$0xff]
        %v524 = vld [vmem:[#allocation2 + $0x6b8] sm:$0xff]
        %v525 = vld [vmem:[#allocation2 + $0x6c0] sm:$0xff]
        %v526 = vld [vmem:[#allocation2 + $0x6c8] sm:$0xff]
        %v527 = vld [vmem:[#allocation2 + $0x6d0] sm:$0xff]
        %v528 = vld [vmem:[#allocation2 + $0x6d8] sm:$0xff]
        %v529 = vld [vmem:[#allocation2 + $0x6e0] sm:$0xff]
        %v530 = vld [vmem:[#allocation2 + $0x6e8] sm:$0xff]
        %v531 = vld [vmem:[#allocation2 + $0x6f0] sm:$0xff]
        %v532 = vld [vmem:[#allocation2 + $0x6f8] sm:$0xff]
        %v533 = vld [vmem:[%s2] sm:$0xf]
        %v535 = vlaneseq
        %v536 = vshrl.u32 %v535, 7
        %v537 = vsub.s32 0, %v536
        %v538 = vrot.slane %v533, %v537
        %v539 = vlaneseq
        %v540 = vshrl.u32 %v539, 7
        %v541 = vsub.s32 1, %v540
        %v542 = vrot.slane %v533, %v541
        %v543 = vlaneseq
        %v544 = vshrl.u32 %v543, 7
        %v545 = vsub.s32 2, %v544
        %v546 = vrot.slane %v533, %v545
        %v547 = vlaneseq
        %v548 = vshrl.u32 %v547, 7
        %v549 = vsub.s32 3, %v548
        %v550 = vrot.slane %v533, %v549
        %v563 = vunpack.c.l.b16 %v301
        %v564 = vunpack.c.h.b16 %v301
        %v565 = vunpack.c.l.b16 %v302
        %v566 = vunpack.c.h.b16 %v302
        %v567 = vunpack.c.l.b16 %v303
        %v568 = vunpack.c.h.b16 %v303
        %v569 = vunpack.c.l.b16 %v304
        %v570 = vunpack.c.l.b16 %v305
        %v571 = vunpack.c.h.b16 %v305
        %v572 = vunpack.c.l.b16 %v306
        %v573 = vunpack.c.h.b16 %v306
        %v574 = vunpack.c.l.b16 %v307
        %v575 = vunpack.c.h.b16 %v307
        %v576 = vunpack.c.l.b16 %v308
        %v577 = vpack.c.b16 %v570, %v563
        %v578 = vpack.c.b16 %v571, %v564
        %v579 = vpack.c.b16 %v572, %v565
        %v580 = vpack.c.b16 %v573, %v566
        %v581 = vpack.c.b16 %v574, %v567
        %v582 = vpack.c.b16 %v575, %v568
        %v583 = vpack.c.b16 %v576, %v569
        %v815 = vunpack.c.l.b16 %v309
        %v816 = vunpack.c.h.b16 %v309
        %v817 = vunpack.c.l.b16 %v310
        %v818 = vunpack.c.h.b16 %v310
        %v819 = vunpack.c.l.b16 %v311
        %v820 = vunpack.c.h.b16 %v311
        %v821 = vunpack.c.l.b16 %v312
        %v822 = vunpack.c.h.b16 %v312
        %v823 = vunpack.c.l.b16 %v313
        %v824 = vunpack.c.h.b16 %v313
        %v825 = vunpack.c.l.b16 %v314
        %v826 = vunpack.c.h.b16 %v314
        %v827 = vunpack.c.l.b16 %v315
        %v828 = vunpack.c.h.b16 %v315
        %v829 = vunpack.c.l.b16 %v316
        %v830 = vunpack.c.h.b16 %v316
        %v831 = vunpack.c.l.b16 %v317
        %v832 = vunpack.c.h.b16 %v317
        %v833 = vunpack.c.l.b16 %v318
        %v834 = vunpack.c.h.b16 %v318
        %v835 = vunpack.c.l.b16 %v319
        %v836 = vunpack.c.h.b16 %v319
        %v837 = vunpack.c.l.b16 %v320
        %v838 = vunpack.c.h.b16 %v320
        %v839 = vunpack.c.l.b16 %v321
        %v840 = vunpack.c.h.b16 %v321
        %v841 = vunpack.c.l.b16 %v322
        %v842 = vunpack.c.h.b16 %v322
        %v843 = vunpack.c.l.b16 %v323
        %v844 = vunpack.c.h.b16 %v323
        %v845 = vunpack.c.l.b16 %v324
        %v846 = vunpack.c.h.b16 %v324
        %v847 = vunpack.c.l.b16 %v325
        %v848 = vunpack.c.h.b16 %v325
        %v849 = vunpack.c.l.b16 %v326
        %v850 = vunpack.c.h.b16 %v326
        %v851 = vunpack.c.l.b16 %v327
        %v852 = vunpack.c.h.b16 %v327
        %v853 = vunpack.c.l.b16 %v328
        %v854 = vunpack.c.h.b16 %v328
        %v855 = vunpack.c.l.b16 %v329
        %v856 = vunpack.c.h.b16 %v329
        %v857 = vunpack.c.l.b16 %v330
        %v858 = vunpack.c.h.b16 %v330
        %v859 = vunpack.c.l.b16 %v331
        %v860 = vunpack.c.h.b16 %v331
        %v861 = vunpack.c.l.b16 %v332
        %v862 = vunpack.c.h.b16 %v332
        %v863 = vunpack.c.l.b16 %v333
        %v864 = vunpack.c.h.b16 %v333
        %v865 = vunpack.c.l.b16 %v334
        %v866 = vunpack.c.h.b16 %v334
        %v867 = vunpack.c.l.b16 %v335
        %v868 = vunpack.c.h.b16 %v335
        %v869 = vunpack.c.l.b16 %v336
        %v870 = vunpack.c.h.b16 %v336
        %v871 = vunpack.c.l.b16 %v337
        %v872 = vunpack.c.h.b16 %v337
        %v873 = vunpack.c.l.b16 %v338
        %v874 = vunpack.c.h.b16 %v338
        %v875 = vunpack.c.l.b16 %v339
        %v876 = vunpack.c.h.b16 %v339
        %v877 = vunpack.c.l.b16 %v340
        %v878 = vunpack.c.h.b16 %v340
        %v879 = vunpack.c.l.b16 %v341
        %v880 = vunpack.c.h.b16 %v341
        %v881 = vunpack.c.l.b16 %v342
        %v882 = vunpack.c.h.b16 %v342
        %v883 = vunpack.c.l.b16 %v343
        %v884 = vunpack.c.h.b16 %v343
        %v885 = vunpack.c.l.b16 %v344
        %v886 = vunpack.c.h.b16 %v344
        %v887 = vunpack.c.l.b16 %v345
        %v888 = vunpack.c.h.b16 %v345
        %v889 = vunpack.c.l.b16 %v346
        %v890 = vunpack.c.h.b16 %v346
        %v891 = vunpack.c.l.b16 %v347
        %v892 = vunpack.c.h.b16 %v347
        %v893 = vunpack.c.l.b16 %v348
        %v894 = vunpack.c.h.b16 %v348
        %v895 = vunpack.c.l.b16 %v349
        %v896 = vunpack.c.h.b16 %v349
        %v897 = vunpack.c.l.b16 %v350
        %v898 = vunpack.c.h.b16 %v350
        %v899 = vunpack.c.l.b16 %v351
        %v900 = vunpack.c.h.b16 %v351
        %v901 = vunpack.c.l.b16 %v352
        %v902 = vunpack.c.h.b16 %v352
        %v903 = vunpack.c.l.b16 %v353
        %v904 = vunpack.c.h.b16 %v353
        %v905 = vunpack.c.l.b16 %v354
        %v906 = vunpack.c.h.b16 %v354
        %v907 = vunpack.c.l.b16 %v355
        %v908 = vunpack.c.h.b16 %v355
        %v909 = vunpack.c.l.b16 %v356
        %v910 = vunpack.c.h.b16 %v356
        %v911 = vunpack.c.l.b16 %v357
        %v912 = vunpack.c.h.b16 %v357
        %v913 = vunpack.c.l.b16 %v358
        %v914 = vunpack.c.h.b16 %v358
        %v915 = vunpack.c.l.b16 %v359
        %v916 = vunpack.c.h.b16 %v359
        %v917 = vunpack.c.l.b16 %v360
        %v918 = vunpack.c.h.b16 %v360
        %v919 = vunpack.c.l.b16 %v361
        %v920 = vunpack.c.h.b16 %v361
        %v921 = vunpack.c.l.b16 %v362
        %v922 = vunpack.c.h.b16 %v362
        %v923 = vunpack.c.l.b16 %v363
        %v924 = vunpack.c.h.b16 %v363
        %v925 = vunpack.c.l.b16 %v364
        %v926 = vunpack.c.h.b16 %v364
        %v927 = vunpack.c.l.b16 %v365
        %v928 = vunpack.c.h.b16 %v365
        %v929 = vunpack.c.l.b16 %v366
        %v930 = vunpack.c.h.b16 %v366
        %v931 = vunpack.c.l.b16 %v367
        %v932 = vunpack.c.h.b16 %v367
        %v933 = vunpack.c.l.b16 %v368
        %v934 = vunpack.c.h.b16 %v368
        %v935 = vunpack.c.l.b16 %v369
        %v936 = vunpack.c.h.b16 %v369
        %v937 = vunpack.c.l.b16 %v370
        %v938 = vunpack.c.h.b16 %v370
        %v939 = vunpack.c.l.b16 %v371
        %v940 = vunpack.c.h.b16 %v371
        %v941 = vunpack.c.l.b16 %v372
        %v942 = vunpack.c.h.b16 %v372
        %v943 = vunpack.c.l.b16 %v373
        %v944 = vunpack.c.h.b16 %v373
        %v945 = vunpack.c.l.b16 %v374
        %v946 = vunpack.c.h.b16 %v374
        %v947 = vunpack.c.l.b16 %v375
        %v948 = vunpack.c.h.b16 %v375
        %v949 = vunpack.c.l.b16 %v376
        %v950 = vunpack.c.h.b16 %v376
        %v951 = vunpack.c.l.b16 %v377
        %v952 = vunpack.c.h.b16 %v377
        %v953 = vunpack.c.l.b16 %v378
        %v954 = vunpack.c.h.b16 %v378
        %v955 = vunpack.c.l.b16 %v379
        %v956 = vunpack.c.h.b16 %v379
        %v957 = vunpack.c.l.b16 %v380
        %v958 = vunpack.c.h.b16 %v380
        %v959 = vunpack.c.l.b16 %v381
        %v960 = vunpack.c.h.b16 %v381
        %v961 = vunpack.c.l.b16 %v382
        %v962 = vunpack.c.h.b16 %v382
        %v963 = vunpack.c.l.b16 %v383
        %v964 = vunpack.c.h.b16 %v383
        %v965 = vunpack.c.l.b16 %v384
        %v966 = vunpack.c.h.b16 %v384
        %v967 = vunpack.c.l.b16 %v385
        %v968 = vunpack.c.h.b16 %v385
        %v969 = vunpack.c.l.b16 %v386
        %v970 = vunpack.c.h.b16 %v386
        %v971 = vunpack.c.l.b16 %v387
        %v972 = vunpack.c.h.b16 %v387
        %v973 = vunpack.c.l.b16 %v388
        %v974 = vunpack.c.h.b16 %v388
        %v975 = vunpack.c.l.b16 %v389
        %v976 = vunpack.c.h.b16 %v389
        %v977 = vunpack.c.l.b16 %v390
        %v978 = vunpack.c.h.b16 %v390
        %v979 = vunpack.c.l.b16 %v391
        %v980 = vunpack.c.h.b16 %v391
        %v981 = vunpack.c.l.b16 %v392
        %v982 = vunpack.c.h.b16 %v392
        %v983 = vunpack.c.l.b16 %v393
        %v984 = vunpack.c.h.b16 %v393
        %v985 = vunpack.c.l.b16 %v394
        %v986 = vunpack.c.h.b16 %v394
        %v987 = vunpack.c.l.b16 %v395
        %v988 = vunpack.c.h.b16 %v395
        %v989 = vunpack.c.l.b16 %v396
        %v990 = vunpack.c.h.b16 %v396
        %v991 = vunpack.c.l.b16 %v397
        %v992 = vunpack.c.h.b16 %v397
        %v993 = vunpack.c.l.b16 %v398
        %v994 = vunpack.c.h.b16 %v398
        %v995 = vunpack.c.l.b16 %v399
        %v996 = vunpack.c.h.b16 %v399
        %v997 = vunpack.c.l.b16 %v400
        %v998 = vunpack.c.h.b16 %v400
        %v999 = vunpack.c.l.b16 %v401
        %v1000 = vunpack.c.h.b16 %v401
        %v1001 = vunpack.c.l.b16 %v402
        %v1002 = vunpack.c.h.b16 %v402
        %v1003 = vunpack.c.l.b16 %v403
        %v1004 = vunpack.c.h.b16 %v403
        %v1005 = vunpack.c.l.b16 %v404
        %v1006 = vunpack.c.h.b16 %v404
        %v1007 = vunpack.c.l.b16 %v405
        %v1008 = vunpack.c.h.b16 %v405
        %v1009 = vunpack.c.l.b16 %v406
        %v1010 = vunpack.c.h.b16 %v406
        %v1011 = vunpack.c.l.b16 %v407
        %v1012 = vunpack.c.h.b16 %v407
        %v1013 = vunpack.c.l.b16 %v408
        %v1014 = vunpack.c.h.b16 %v408
        %v1015 = vunpack.c.l.b16 %v409
        %v1016 = vunpack.c.h.b16 %v409
        %v1017 = vunpack.c.l.b16 %v410
        %v1018 = vunpack.c.h.b16 %v410
        %v1019 = vunpack.c.l.b16 %v411
        %v1020 = vunpack.c.h.b16 %v411
        %v1021 = vunpack.c.l.b16 %v412
        %v1022 = vunpack.c.h.b16 %v412
        %v1023 = vunpack.c.l.b16 %v413
        %v1024 = vunpack.c.h.b16 %v413
        %v1025 = vunpack.c.l.b16 %v414
        %v1026 = vunpack.c.h.b16 %v414
        %v1027 = vunpack.c.l.b16 %v415
        %v1028 = vunpack.c.h.b16 %v415
        %v1029 = vunpack.c.l.b16 %v416
        %v1030 = vunpack.c.h.b16 %v416
        %v1031 = vunpack.c.l.b16 %v417
        %v1032 = vunpack.c.h.b16 %v417
        %v1033 = vunpack.c.l.b16 %v418
        %v1034 = vunpack.c.h.b16 %v418
        %v1035 = vunpack.c.l.b16 %v419
        %v1036 = vunpack.c.h.b16 %v419
        %v1037 = vunpack.c.l.b16 %v420
        %v1038 = vunpack.c.h.b16 %v420
        %v1039 = vunpack.c.l.b16 %v421
        %v1040 = vunpack.c.h.b16 %v421
        %v1041 = vunpack.c.l.b16 %v422
        %v1042 = vunpack.c.h.b16 %v422
        %v1043 = vunpack.c.l.b16 %v423
        %v1044 = vunpack.c.h.b16 %v423
        %v1045 = vunpack.c.l.b16 %v424
        %v1046 = vunpack.c.h.b16 %v424
        %v1047 = vunpack.c.l.b16 %v425
        %v1048 = vunpack.c.h.b16 %v425
        %v1049 = vunpack.c.l.b16 %v426
        %v1050 = vunpack.c.h.b16 %v426
        %v1051 = vunpack.c.l.b16 %v427
        %v1052 = vunpack.c.h.b16 %v427
        %v1053 = vunpack.c.l.b16 %v428
        %v1054 = vunpack.c.h.b16 %v428
        %v1055 = vunpack.c.l.b16 %v429
        %v1056 = vunpack.c.h.b16 %v429
        %v1057 = vunpack.c.l.b16 %v430
        %v1058 = vunpack.c.h.b16 %v430
        %v1059 = vunpack.c.l.b16 %v431
        %v1060 = vunpack.c.h.b16 %v431
        %v1061 = vunpack.c.l.b16 %v432
        %v1062 = vunpack.c.h.b16 %v432
        %v1063 = vunpack.c.l.b16 %v433
        %v1064 = vunpack.c.h.b16 %v433
        %v1065 = vunpack.c.l.b16 %v434
        %v1066 = vunpack.c.h.b16 %v434
        %v1067 = vunpack.c.l.b16 %v435
        %v1068 = vunpack.c.h.b16 %v435
        %v1069 = vunpack.c.l.b16 %v436
        %v1070 = vunpack.c.h.b16 %v436
        %v1071 = vunpack.c.l.b16 %v437
        %v1072 = vunpack.c.h.b16 %v437
        %v1073 = vunpack.c.l.b16 %v438
        %v1074 = vunpack.c.h.b16 %v438
        %v1075 = vunpack.c.l.b16 %v439
        %v1076 = vunpack.c.h.b16 %v439
        %v1077 = vunpack.c.l.b16 %v440
        %v1078 = vunpack.c.h.b16 %v440
        %v1079 = vunpack.c.l.b16 %v441
        %v1080 = vunpack.c.h.b16 %v441
        %v1081 = vunpack.c.l.b16 %v442
        %v1082 = vunpack.c.h.b16 %v442
        %v1083 = vunpack.c.l.b16 %v443
        %v1084 = vunpack.c.h.b16 %v443
        %v1085 = vunpack.c.l.b16 %v444
        %v1086 = vunpack.c.h.b16 %v444
        %v1087 = vunpack.c.l.b16 %v445
        %v1088 = vunpack.c.h.b16 %v445
        %v1089 = vunpack.c.l.b16 %v446
        %v1090 = vunpack.c.h.b16 %v446
        %v1091 = vunpack.c.l.b16 %v447
        %v1092 = vunpack.c.h.b16 %v447
        %v1093 = vunpack.c.l.b16 %v448
        %v1094 = vunpack.c.h.b16 %v448
        %v1095 = vunpack.c.l.b16 %v449
        %v1096 = vunpack.c.h.b16 %v449
        %v1097 = vunpack.c.l.b16 %v450
        %v1098 = vunpack.c.h.b16 %v450
        %v1099 = vunpack.c.l.b16 %v451
        %v1100 = vunpack.c.h.b16 %v451
        %v1101 = vunpack.c.l.b16 %v452
        %v1102 = vunpack.c.h.b16 %v452
        %v1103 = vunpack.c.l.b16 %v453
        %v1104 = vunpack.c.h.b16 %v453
        %v1105 = vunpack.c.l.b16 %v454
        %v1106 = vunpack.c.h.b16 %v454
        %v1107 = vunpack.c.l.b16 %v455
        %v1108 = vunpack.c.h.b16 %v455
        %v1109 = vunpack.c.l.b16 %v456
        %v1110 = vunpack.c.h.b16 %v456
        %v1111 = vunpack.c.l.b16 %v457
        %v1112 = vunpack.c.h.b16 %v457
        %v1113 = vunpack.c.l.b16 %v458
        %v1114 = vunpack.c.h.b16 %v458
        %v1115 = vunpack.c.l.b16 %v459
        %v1116 = vunpack.c.h.b16 %v459
        %v1117 = vunpack.c.l.b16 %v460
        %v1118 = vunpack.c.h.b16 %v460
        %v1119 = vunpack.c.l.b16 %v461
        %v1120 = vunpack.c.h.b16 %v461
        %v1121 = vunpack.c.l.b16 %v462
        %v1122 = vunpack.c.h.b16 %v462
        %v1123 = vunpack.c.l.b16 %v463
        %v1124 = vunpack.c.h.b16 %v463
        %v1125 = vunpack.c.l.b16 %v464
        %v1126 = vunpack.c.h.b16 %v464
        %v1127 = vunpack.c.l.b16 %v465
        %v1128 = vunpack.c.h.b16 %v465
        %v1129 = vunpack.c.l.b16 %v466
        %v1130 = vunpack.c.h.b16 %v466
        %v1131 = vunpack.c.l.b16 %v467
        %v1132 = vunpack.c.h.b16 %v467
        %v1133 = vunpack.c.l.b16 %v468
        %v1134 = vunpack.c.h.b16 %v468
        %v1135 = vunpack.c.l.b16 %v469
        %v1136 = vunpack.c.h.b16 %v469
        %v1137 = vunpack.c.l.b16 %v470
        %v1138 = vunpack.c.h.b16 %v470
        %v1139 = vunpack.c.l.b16 %v471
        %v1140 = vunpack.c.h.b16 %v471
        %v1141 = vunpack.c.l.b16 %v472
        %v1142 = vunpack.c.h.b16 %v472
        %v1143 = vunpack.c.l.b16 %v473
        %v1144 = vunpack.c.h.b16 %v473
        %v1145 = vunpack.c.l.b16 %v474
        %v1146 = vunpack.c.h.b16 %v474
        %v1147 = vunpack.c.l.b16 %v475
        %v1148 = vunpack.c.h.b16 %v475
        %v1149 = vunpack.c.l.b16 %v476
        %v1150 = vunpack.c.h.b16 %v476
        %v1151 = vunpack.c.l.b16 %v477
        %v1152 = vunpack.c.h.b16 %v477
        %v1153 = vunpack.c.l.b16 %v478
        %v1154 = vunpack.c.h.b16 %v478
        %v1155 = vunpack.c.l.b16 %v479
        %v1156 = vunpack.c.h.b16 %v479
        %v1157 = vunpack.c.l.b16 %v480
        %v1158 = vunpack.c.h.b16 %v480
        %v1159 = vunpack.c.l.b16 %v481
        %v1160 = vunpack.c.h.b16 %v481
        %v1161 = vunpack.c.l.b16 %v482
        %v1162 = vunpack.c.h.b16 %v482
        %v1163 = vunpack.c.l.b16 %v483
        %v1164 = vunpack.c.h.b16 %v483
        %v1165 = vunpack.c.l.b16 %v484
        %v1166 = vunpack.c.h.b16 %v484
        %v1167 = vunpack.c.l.b16 %v485
        %v1168 = vunpack.c.h.b16 %v485
        %v1169 = vunpack.c.l.b16 %v486
        %v1170 = vunpack.c.h.b16 %v486
        %v1171 = vunpack.c.l.b16 %v487
        %v1172 = vunpack.c.h.b16 %v487
        %v1173 = vunpack.c.l.b16 %v488
        %v1174 = vunpack.c.h.b16 %v488
        %v1175 = vunpack.c.l.b16 %v489
        %v1176 = vunpack.c.h.b16 %v489
        %v1177 = vunpack.c.l.b16 %v490
        %v1178 = vunpack.c.h.b16 %v490
        %v1179 = vunpack.c.l.b16 %v491
        %v1180 = vunpack.c.h.b16 %v491
        %v1181 = vunpack.c.l.b16 %v492
        %v1182 = vunpack.c.h.b16 %v492
        %v1183 = vunpack.c.l.b16 %v493
        %v1184 = vunpack.c.h.b16 %v493
        %v1185 = vunpack.c.l.b16 %v494
        %v1186 = vunpack.c.h.b16 %v494
        %v1187 = vunpack.c.l.b16 %v495
        %v1188 = vunpack.c.h.b16 %v495
        %v1189 = vunpack.c.l.b16 %v496
        %v1190 = vunpack.c.h.b16 %v496
        %v1191 = vunpack.c.l.b16 %v497
        %v1192 = vunpack.c.h.b16 %v497
        %v1193 = vunpack.c.l.b16 %v498
        %v1194 = vunpack.c.h.b16 %v498
        %v1195 = vunpack.c.l.b16 %v499
        %v1196 = vunpack.c.h.b16 %v499
        %v1197 = vunpack.c.l.b16 %v500
        %v1198 = vunpack.c.h.b16 %v500
        %v1199 = vunpack.c.l.b16 %v501
        %v1200 = vunpack.c.h.b16 %v501
        %v1201 = vunpack.c.l.b16 %v502
        %v1202 = vunpack.c.h.b16 %v502
        %v1203 = vunpack.c.l.b16 %v503
        %v1204 = vunpack.c.h.b16 %v503
        %v1205 = vunpack.c.l.b16 %v504
        %v1206 = vunpack.c.h.b16 %v504
        %v1207 = vunpack.c.l.b16 %v505
        %v1208 = vunpack.c.h.b16 %v505
        %v1209 = vunpack.c.l.b16 %v506
        %v1210 = vunpack.c.h.b16 %v506
        %v1211 = vunpack.c.l.b16 %v507
        %v1212 = vunpack.c.h.b16 %v507
        %v1213 = vunpack.c.l.b16 %v508
        %v1214 = vunpack.c.h.b16 %v508
        %v1215 = vunpack.c.l.b16 %v509
        %v1216 = vunpack.c.h.b16 %v509
        %v1217 = vunpack.c.l.b16 %v510
        %v1218 = vunpack.c.h.b16 %v510
        %v1219 = vunpack.c.l.b16 %v511
        %v1220 = vunpack.c.h.b16 %v511
        %v1221 = vunpack.c.l.b16 %v512
        %v1222 = vunpack.c.h.b16 %v512
        %v1223 = vunpack.c.l.b16 %v513
        %v1224 = vunpack.c.h.b16 %v513
        %v1225 = vunpack.c.l.b16 %v514
        %v1226 = vunpack.c.h.b16 %v514
        %v1227 = vunpack.c.l.b16 %v515
        %v1228 = vunpack.c.h.b16 %v515
        %v1229 = vunpack.c.l.b16 %v516
        %v1230 = vunpack.c.h.b16 %v516
        %v1231 = vunpack.c.l.b16 %v517
        %v1232 = vunpack.c.h.b16 %v517
        %v1233 = vunpack.c.l.b16 %v518
        %v1234 = vunpack.c.h.b16 %v518
        %v1235 = vunpack.c.l.b16 %v519
        %v1236 = vunpack.c.h.b16 %v519
        %v1237 = vunpack.c.l.b16 %v520
        %v1238 = vunpack.c.h.b16 %v520
        %v1239 = vunpack.c.l.b16 %v521
        %v1240 = vunpack.c.h.b16 %v521
        %v1241 = vunpack.c.l.b16 %v522
        %v1242 = vunpack.c.h.b16 %v522
        %v1243 = vunpack.c.l.b16 %v523
        %v1244 = vunpack.c.h.b16 %v523
        %v1245 = vunpack.c.l.b16 %v524
        %v1246 = vunpack.c.h.b16 %v524
        %v1247 = vunpack.c.l.b16 %v525
        %v1248 = vunpack.c.h.b16 %v525
        %v1249 = vunpack.c.l.b16 %v526
        %v1250 = vunpack.c.h.b16 %v526
        %v1251 = vunpack.c.l.b16 %v527
        %v1252 = vunpack.c.h.b16 %v527
        %v1253 = vunpack.c.l.b16 %v528
        %v1254 = vunpack.c.h.b16 %v528
        %v1255 = vunpack.c.l.b16 %v529
        %v1256 = vunpack.c.h.b16 %v529
        %v1257 = vunpack.c.l.b16 %v530
        %v1258 = vunpack.c.h.b16 %v530
        %v1259 = vunpack.c.l.b16 %v531
        %v1260 = vunpack.c.h.b16 %v531
        %v1261 = vunpack.c.l.b16 %v532
        %v1262 = vunpack.c.h.b16 %v532
        %v1263 = vpack.c.b16 %v819, %v815
        %v1264 = vpack.c.b16 %v820, %v816
        %v1265 = vpack.c.b16 %v821, %v817
        %v1266 = vpack.c.b16 %v822, %v818
        %v1267 = vpack.c.b16 %v827, %v823
        %v1268 = vpack.c.b16 %v828, %v824
        %v1269 = vpack.c.b16 %v829, %v825
        %v1270 = vpack.c.b16 %v830, %v826
        %v1271 = vpack.c.b16 %v835, %v831
        %v1272 = vpack.c.b16 %v836, %v832
        %v1273 = vpack.c.b16 %v837, %v833
        %v1274 = vpack.c.b16 %v838, %v834
        %v1275 = vpack.c.b16 %v843, %v839
        %v1276 = vpack.c.b16 %v844, %v840
        %v1277 = vpack.c.b16 %v845, %v841
        %v1278 = vpack.c.b16 %v846, %v842
        %v1279 = vpack.c.b16 %v851, %v847
        %v1280 = vpack.c.b16 %v852, %v848
        %v1281 = vpack.c.b16 %v853, %v849
        %v1282 = vpack.c.b16 %v854, %v850
        %v1283 = vpack.c.b16 %v859, %v855
        %v1284 = vpack.c.b16 %v860, %v856
        %v1285 = vpack.c.b16 %v861, %v857
        %v1286 = vpack.c.b16 %v862, %v858
        %v1287 = vpack.c.b16 %v867, %v863
        %v1288 = vpack.c.b16 %v868, %v864
        %v1289 = vpack.c.b16 %v869, %v865
        %v1290 = vpack.c.b16 %v870, %v866
        %v1291 = vpack.c.b16 %v875, %v871
        %v1292 = vpack.c.b16 %v876, %v872
        %v1293 = vpack.c.b16 %v877, %v873
        %v1294 = vpack.c.b16 %v878, %v874
        %v1295 = vpack.c.b16 %v883, %v879
        %v1296 = vpack.c.b16 %v884, %v880
        %v1297 = vpack.c.b16 %v885, %v881
        %v1298 = vpack.c.b16 %v886, %v882
        %v1299 = vpack.c.b16 %v891, %v887
        %v1300 = vpack.c.b16 %v892, %v888
        %v1301 = vpack.c.b16 %v893, %v889
        %v1302 = vpack.c.b16 %v894, %v890
        %v1303 = vpack.c.b16 %v899, %v895
        %v1304 = vpack.c.b16 %v900, %v896
        %v1305 = vpack.c.b16 %v901, %v897
        %v1306 = vpack.c.b16 %v902, %v898
        %v1307 = vpack.c.b16 %v907, %v903
        %v1308 = vpack.c.b16 %v908, %v904
        %v1309 = vpack.c.b16 %v909, %v905
        %v1310 = vpack.c.b16 %v910, %v906
        %v1311 = vpack.c.b16 %v915, %v911
        %v1312 = vpack.c.b16 %v916, %v912
        %v1313 = vpack.c.b16 %v917, %v913
        %v1314 = vpack.c.b16 %v918, %v914
        %v1315 = vpack.c.b16 %v923, %v919
        %v1316 = vpack.c.b16 %v924, %v920
        %v1317 = vpack.c.b16 %v925, %v921
        %v1318 = vpack.c.b16 %v926, %v922
        %v1319 = vpack.c.b16 %v931, %v927
        %v1320 = vpack.c.b16 %v932, %v928
        %v1321 = vpack.c.b16 %v933, %v929
        %v1322 = vpack.c.b16 %v934, %v930
        %v1323 = vpack.c.b16 %v939, %v935
        %v1324 = vpack.c.b16 %v940, %v936
        %v1325 = vpack.c.b16 %v941, %v937
        %v1326 = vpack.c.b16 %v942, %v938
        %v1327 = vpack.c.b16 %v947, %v943
        %v1328 = vpack.c.b16 %v948, %v944
        %v1329 = vpack.c.b16 %v949, %v945
        %v1330 = vpack.c.b16 %v950, %v946
        %v1331 = vpack.c.b16 %v955, %v951
        %v1332 = vpack.c.b16 %v956, %v952
        %v1333 = vpack.c.b16 %v957, %v953
        %v1334 = vpack.c.b16 %v958, %v954
        %v1335 = vpack.c.b16 %v963, %v959
        %v1336 = vpack.c.b16 %v964, %v960
        %v1337 = vpack.c.b16 %v965, %v961
        %v1338 = vpack.c.b16 %v966, %v962
        %v1339 = vpack.c.b16 %v971, %v967
        %v1340 = vpack.c.b16 %v972, %v968
        %v1341 = vpack.c.b16 %v973, %v969
        %v1342 = vpack.c.b16 %v974, %v970
        %v1343 = vpack.c.b16 %v979, %v975
        %v1344 = vpack.c.b16 %v980, %v976
        %v1345 = vpack.c.b16 %v981, %v977
        %v1346 = vpack.c.b16 %v982, %v978
        %v1347 = vpack.c.b16 %v987, %v983
        %v1348 = vpack.c.b16 %v988, %v984
        %v1349 = vpack.c.b16 %v989, %v985
        %v1350 = vpack.c.b16 %v990, %v986
        %v1351 = vpack.c.b16 %v995, %v991
        %v1352 = vpack.c.b16 %v996, %v992
        %v1353 = vpack.c.b16 %v997, %v993
        %v1354 = vpack.c.b16 %v998, %v994
        %v1355 = vpack.c.b16 %v1003, %v999
        %v1356 = vpack.c.b16 %v1004, %v1000
        %v1357 = vpack.c.b16 %v1005, %v1001
        %v1358 = vpack.c.b16 %v1006, %v1002
        %v1359 = vpack.c.b16 %v1011, %v1007
        %v1360 = vpack.c.b16 %v1012, %v1008
        %v1361 = vpack.c.b16 %v1013, %v1009
        %v1362 = vpack.c.b16 %v1014, %v1010
        %v1363 = vpack.c.b16 %v1019, %v1015
        %v1364 = vpack.c.b16 %v1020, %v1016
        %v1365 = vpack.c.b16 %v1021, %v1017
        %v1366 = vpack.c.b16 %v1022, %v1018
        %v1367 = vpack.c.b16 %v1027, %v1023
        %v1368 = vpack.c.b16 %v1028, %v1024
        %v1369 = vpack.c.b16 %v1029, %v1025
        %v1370 = vpack.c.b16 %v1030, %v1026
        %v1371 = vpack.c.b16 %v1035, %v1031
        %v1372 = vpack.c.b16 %v1036, %v1032
        %v1373 = vpack.c.b16 %v1037, %v1033
        %v1374 = vpack.c.b16 %v1038, %v1034
        %v1375 = vpack.c.b16 %v1043, %v1039
        %v1376 = vpack.c.b16 %v1044, %v1040
        %v1377 = vpack.c.b16 %v1045, %v1041
        %v1378 = vpack.c.b16 %v1046, %v1042
        %v1379 = vpack.c.b16 %v1051, %v1047
        %v1380 = vpack.c.b16 %v1052, %v1048
        %v1381 = vpack.c.b16 %v1053, %v1049
        %v1382 = vpack.c.b16 %v1054, %v1050
        %v1383 = vpack.c.b16 %v1059, %v1055
        %v1384 = vpack.c.b16 %v1060, %v1056
        %v1385 = vpack.c.b16 %v1061, %v1057
        %v1386 = vpack.c.b16 %v1062, %v1058
        %v1387 = vpack.c.b16 %v1067, %v1063
        %v1388 = vpack.c.b16 %v1068, %v1064
        %v1389 = vpack.c.b16 %v1069, %v1065
        %v1390 = vpack.c.b16 %v1070, %v1066
        %v1391 = vpack.c.b16 %v1075, %v1071
        %v1392 = vpack.c.b16 %v1076, %v1072
        %v1393 = vpack.c.b16 %v1077, %v1073
        %v1394 = vpack.c.b16 %v1078, %v1074
        %v1395 = vpack.c.b16 %v1083, %v1079
        %v1396 = vpack.c.b16 %v1084, %v1080
        %v1397 = vpack.c.b16 %v1085, %v1081
        %v1398 = vpack.c.b16 %v1086, %v1082
        %v1399 = vpack.c.b16 %v1091, %v1087
        %v1400 = vpack.c.b16 %v1092, %v1088
        %v1401 = vpack.c.b16 %v1093, %v1089
        %v1402 = vpack.c.b16 %v1094, %v1090
        %v1403 = vpack.c.b16 %v1099, %v1095
        %v1404 = vpack.c.b16 %v1100, %v1096
        %v1405 = vpack.c.b16 %v1101, %v1097
        %v1406 = vpack.c.b16 %v1102, %v1098
        %v1407 = vpack.c.b16 %v1107, %v1103
        %v1408 = vpack.c.b16 %v1108, %v1104
        %v1409 = vpack.c.b16 %v1109, %v1105
        %v1410 = vpack.c.b16 %v1110, %v1106
        %v1411 = vpack.c.b16 %v1115, %v1111
        %v1412 = vpack.c.b16 %v1116, %v1112
        %v1413 = vpack.c.b16 %v1117, %v1113
        %v1414 = vpack.c.b16 %v1118, %v1114
        %v1415 = vpack.c.b16 %v1123, %v1119
        %v1416 = vpack.c.b16 %v1124, %v1120
        %v1417 = vpack.c.b16 %v1125, %v1121
        %v1418 = vpack.c.b16 %v1126, %v1122
        %v1419 = vpack.c.b16 %v1131, %v1127
        %v1420 = vpack.c.b16 %v1132, %v1128
        %v1421 = vpack.c.b16 %v1133, %v1129
        %v1422 = vpack.c.b16 %v1134, %v1130
        %v1423 = vpack.c.b16 %v1139, %v1135
        %v1424 = vpack.c.b16 %v1140, %v1136
        %v1425 = vpack.c.b16 %v1141, %v1137
        %v1426 = vpack.c.b16 %v1142, %v1138
        %v1427 = vpack.c.b16 %v1147, %v1143
        %v1428 = vpack.c.b16 %v1148, %v1144
        %v1429 = vpack.c.b16 %v1149, %v1145
        %v1430 = vpack.c.b16 %v1150, %v1146
        %v1431 = vpack.c.b16 %v1155, %v1151
        %v1432 = vpack.c.b16 %v1156, %v1152
        %v1433 = vpack.c.b16 %v1157, %v1153
        %v1434 = vpack.c.b16 %v1158, %v1154
        %v1435 = vpack.c.b16 %v1163, %v1159
        %v1436 = vpack.c.b16 %v1164, %v1160
        %v1437 = vpack.c.b16 %v1165, %v1161
        %v1438 = vpack.c.b16 %v1166, %v1162
        %v1439 = vpack.c.b16 %v1171, %v1167
        %v1440 = vpack.c.b16 %v1172, %v1168
        %v1441 = vpack.c.b16 %v1173, %v1169
        %v1442 = vpack.c.b16 %v1174, %v1170
        %v1443 = vpack.c.b16 %v1179, %v1175
        %v1444 = vpack.c.b16 %v1180, %v1176
        %v1445 = vpack.c.b16 %v1181, %v1177
        %v1446 = vpack.c.b16 %v1182, %v1178
        %v1447 = vpack.c.b16 %v1187, %v1183
        %v1448 = vpack.c.b16 %v1188, %v1184
        %v1449 = vpack.c.b16 %v1189, %v1185
        %v1450 = vpack.c.b16 %v1190, %v1186
        %v1451 = vpack.c.b16 %v1195, %v1191
        %v1452 = vpack.c.b16 %v1196, %v1192
        %v1453 = vpack.c.b16 %v1197, %v1193
        %v1454 = vpack.c.b16 %v1198, %v1194
        %v1455 = vpack.c.b16 %v1203, %v1199
        %v1456 = vpack.c.b16 %v1204, %v1200
        %v1457 = vpack.c.b16 %v1205, %v1201
        %v1458 = vpack.c.b16 %v1206, %v1202
        %v1459 = vpack.c.b16 %v1211, %v1207
        %v1460 = vpack.c.b16 %v1212, %v1208
        %v1461 = vpack.c.b16 %v1213, %v1209
        %v1462 = vpack.c.b16 %v1214, %v1210
        %v1463 = vpack.c.b16 %v1219, %v1215
        %v1464 = vpack.c.b16 %v1220, %v1216
        %v1465 = vpack.c.b16 %v1221, %v1217
        %v1466 = vpack.c.b16 %v1222, %v1218
        %v1467 = vpack.c.b16 %v1227, %v1223
        %v1468 = vpack.c.b16 %v1228, %v1224
        %v1469 = vpack.c.b16 %v1229, %v1225
        %v1470 = vpack.c.b16 %v1230, %v1226
        %v1471 = vpack.c.b16 %v1235, %v1231
        %v1472 = vpack.c.b16 %v1236, %v1232
        %v1473 = vpack.c.b16 %v1237, %v1233
        %v1474 = vpack.c.b16 %v1238, %v1234
        %v1475 = vpack.c.b16 %v1243, %v1239
        %v1476 = vpack.c.b16 %v1244, %v1240
        %v1477 = vpack.c.b16 %v1245, %v1241
        %v1478 = vpack.c.b16 %v1246, %v1242
        %v1479 = vpack.c.b16 %v1251, %v1247
        %v1480 = vpack.c.b16 %v1252, %v1248
        %v1481 = vpack.c.b16 %v1253, %v1249
        %v1482 = vpack.c.b16 %v1254, %v1250
        %v1483 = vpack.c.b16 %v1259, %v1255
        %v1484 = vpack.c.b16 %v1260, %v1256
        %v1485 = vpack.c.b16 %v1261, %v1257
        %v1486 = vpack.c.b16 %v1262, %v1258
        %1711 = vmatprep.subr.bf16.mxu0 %v1264
        %1712 = vmatpush1.bf16.msra.mxu0 %v1263
        %1713 = vmatprep.subr.bf16.mxu0 %v1268
        %1714 = vmatpush1.bf16.msra.mxu0 %v1267
        %1715 = vmatprep.subr.bf16.mxu0 %v1272
        %1716 = vmatpush1.bf16.msra.mxu0 %v1271
        %1717 = vmatprep.subr.bf16.mxu0 %v1276
        %1718 = vmatpush1.bf16.msra.mxu0 %v1275
        %1719 = vmatprep.subr.bf16.mxu0 %v1280
        %1720 = vmatpush1.bf16.msra.mxu0 %v1279
        %1721 = vmatprep.subr.bf16.mxu0 %v1284
        %1722 = vmatpush1.bf16.msra.mxu0 %v1283
        %1723 = vmatprep.subr.bf16.mxu0 %v1288
        %1724 = vmatpush1.bf16.msra.mxu0 %v1287
        %1725 = vmatprep.subr.bf16.mxu0 %v1292
        %1726 = vmatpush1.bf16.msra.mxu0 %v1291
        %1727 = vmatprep.subr.bf16.mxu0 %v1296
        %1728 = vmatpush1.bf16.msra.mxu0 %v1295
        %1729 = vmatprep.subr.bf16.mxu0 %v1300
        %1730 = vmatpush1.bf16.msra.mxu0 %v1299
        %1731 = vmatprep.subr.bf16.mxu0 %v1304
        %1732 = vmatpush1.bf16.msra.mxu0 %v1303
        %1733 = vmatprep.subr.bf16.mxu0 %v1308
        %1734 = vmatpush1.bf16.msra.mxu0 %v1307
        %1735 = vmatprep.subr.bf16.mxu0 %v1312
        %1736 = vmatpush1.bf16.msra.mxu0 %v1311
        %1737 = vmatprep.subr.bf16.mxu0 %v1316
        %1738 = vmatpush1.bf16.msra.mxu0 %v1315
        %1739 = vmatprep.subr.bf16.mxu0 %v1320
        %1740 = vmatpush1.bf16.msra.mxu0 %v1319
        %1741 = vmatprep.subr.bf16.mxu0 %v1324
        %1742 = vmatpush1.bf16.msra.mxu0 %v1323
        %1743 = vmatprep.mubr.bf16.mxu0 %v578
        %1744 = vmatmul.mubr.bf16.gmra.mrb[0].mxu0 %v577
        %v1745 = vpop.f32.mrb[0].mxu0
        %v1746 = vadd.f32 %v538, %v1745
        %v1747 = vpop.f32.mrb[0].mxu0
        %v1748 = vadd.f32 %v542, %v1747
        %v1749 = vpop.f32.mrb[0].mxu0
        %v1750 = vadd.f32 %v538, %v1749
        %v1751 = vpop.f32.mrb[0].mxu0
        %v1752 = vadd.f32 %v542, %v1751
        %1753 = vdwg.mxu0
        %1754 = vmatprep.subr.bf16.mxu0 %v1328
        %1755 = vmatpush1.bf16.msra.mxu0 %v1327
        %1756 = vmatprep.subr.bf16.mxu0 %v1332
        %1757 = vmatpush1.bf16.msra.mxu0 %v1331
        %1758 = vmatprep.subr.bf16.mxu0 %v1336
        %1759 = vmatpush1.bf16.msra.mxu0 %v1335
        %1760 = vmatprep.subr.bf16.mxu0 %v1340
        %1761 = vmatpush1.bf16.msra.mxu0 %v1339
        %1762 = vmatprep.subr.bf16.mxu0 %v1344
        %1763 = vmatpush1.bf16.msra.mxu0 %v1343
        %1764 = vmatprep.subr.bf16.mxu0 %v1348
        %1765 = vmatpush1.bf16.msra.mxu0 %v1347
        %1766 = vmatprep.subr.bf16.mxu0 %v1352
        %1767 = vmatpush1.bf16.msra.mxu0 %v1351
        %1768 = vmatprep.subr.bf16.mxu0 %v1356
        %1769 = vmatpush1.bf16.msra.mxu0 %v1355
        %1770 = vmatprep.subr.bf16.mxu0 %v1360
        %1771 = vmatpush1.bf16.msra.mxu0 %v1359
        %1772 = vmatprep.subr.bf16.mxu0 %v1364
        %1773 = vmatpush1.bf16.msra.mxu0 %v1363
        %1774 = vmatprep.subr.bf16.mxu0 %v1368
        %1775 = vmatpush1.bf16.msra.mxu0 %v1367
        %1776 = vmatprep.subr.bf16.mxu0 %v1372
        %1777 = vmatpush1.bf16.msra.mxu0 %v1371
        %1778 = vmatprep.subr.bf16.mxu0 %v1376
        %1779 = vmatpush1.bf16.msra.mxu0 %v1375
        %1780 = vmatprep.subr.bf16.mxu0 %v1380
        %1781 = vmatpush1.bf16.msra.mxu0 %v1379
        %1782 = vmatprep.subr.bf16.mxu0 %v1384
        %1783 = vmatpush1.bf16.msra.mxu0 %v1383
        %1784 = vmatprep.subr.bf16.mxu0 %v1388
        %1785 = vmatpush1.bf16.msra.mxu0 %v1387
        %1786 = vmatprep.mubr.bf16.mxu0 %v580
        %1787 = vmatmul.mubr.bf16.gmra.mrb[0].mxu0 %v579
        %v1788 = vpop.f32.mrb[0].mxu0
        %v1789 = vadd.f32 %v1746, %v1788
        %v1790 = vpop.f32.mrb[0].mxu0
        %v1791 = vadd.f32 %v1748, %v1790
        %v1792 = vpop.f32.mrb[0].mxu0
        %v1793 = vadd.f32 %v1750, %v1792
        %v1794 = vpop.f32.mrb[0].mxu0
        %v1795 = vadd.f32 %v1752, %v1794
        %1796 = vdwg.mxu0
        %1797 = vmatprep.subr.bf16.mxu0 %v1392
        %1798 = vmatpush1.bf16.msra.mxu0 %v1391
        %1799 = vmatprep.subr.bf16.mxu0 %v1396
        %1800 = vmatpush1.bf16.msra.mxu0 %v1395
        %1801 = vmatprep.subr.bf16.mxu0 %v1400
        %1802 = vmatpush1.bf16.msra.mxu0 %v1399
        %1803 = vmatprep.subr.bf16.mxu0 %v1404
        %1804 = vmatpush1.bf16.msra.mxu0 %v1403
        %1805 = vmatprep.subr.bf16.mxu0 %v1408
        %1806 = vmatpush1.bf16.msra.mxu0 %v1407
        %1807 = vmatprep.subr.bf16.mxu0 %v1412
        %1808 = vmatpush1.bf16.msra.mxu0 %v1411
        %1809 = vmatprep.subr.bf16.mxu0 %v1416
        %1810 = vmatpush1.bf16.msra.mxu0 %v1415
        %1811 = vmatprep.subr.bf16.mxu0 %v1420
        %1812 = vmatpush1.bf16.msra.mxu0 %v1419
        %1813 = vmatprep.subr.bf16.mxu0 %v1424
        %1814 = vmatpush1.bf16.msra.mxu0 %v1423
        %1815 = vmatprep.subr.bf16.mxu0 %v1428
        %1816 = vmatpush1.bf16.msra.mxu0 %v1427
        %1817 = vmatprep.subr.bf16.mxu0 %v1432
        %1818 = vmatpush1.bf16.msra.mxu0 %v1431
        %1819 = vmatprep.subr.bf16.mxu0 %v1436
        %1820 = vmatpush1.bf16.msra.mxu0 %v1435
        %1821 = vmatprep.subr.bf16.mxu0 %v1440
        %1822 = vmatpush1.bf16.msra.mxu0 %v1439
        %1823 = vmatprep.subr.bf16.mxu0 %v1444
        %1824 = vmatpush1.bf16.msra.mxu0 %v1443
        %1825 = vmatprep.subr.bf16.mxu0 %v1448
        %1826 = vmatpush1.bf16.msra.mxu0 %v1447
        %1827 = vmatprep.subr.bf16.mxu0 %v1452
        %1828 = vmatpush1.bf16.msra.mxu0 %v1451
        %1829 = vmatprep.mubr.bf16.mxu0 %v582
        %1830 = vmatmul.mubr.bf16.gmra.mrb[0].mxu0 %v581
        %v1831 = vpop.f32.mrb[0].mxu0
        %v1832 = vadd.f32 %v1789, %v1831
        %v1833 = vpop.f32.mrb[0].mxu0
        %v1834 = vadd.f32 %v1791, %v1833
        %v1835 = vpop.f32.mrb[0].mxu0
        %v1836 = vadd.f32 %v1793, %v1835
        %v1837 = vpop.f32.mrb[0].mxu0
        %v1838 = vadd.f32 %v1795, %v1837
        %1839 = vdwg.mxu0
        %1840 = vmatprep.subr.bf16.mxu0 %v1456
        %1841 = vmatpush1.bf16.msra.mxu0 %v1455
        %1842 = vmatprep.subr.bf16.mxu0 %v1460
        %1843 = vmatpush1.bf16.msra.mxu0 %v1459
        %1844 = vmatprep.subr.bf16.mxu0 %v1464
        %1845 = vmatpush1.bf16.msra.mxu0 %v1463
        %1846 = vmatprep.subr.bf16.mxu0 %v1468
        %1847 = vmatpush1.bf16.msra.mxu0 %v1467
        %1848 = vmatprep.subr.bf16.mxu0 %v1472
        %1849 = vmatpush1.bf16.msra.mxu0 %v1471
        %1850 = vmatprep.subr.bf16.mxu0 %v1476
        %1851 = vmatpush1.bf16.msra.mxu0 %v1475
        %1852 = vmatprep.subr.bf16.mxu0 %v1480
        %1853 = vmatpush1.bf16.msra.mxu0 %v1479
        %1854 = vmatprep.subr.bf16.mxu0 %v1484
        %1855 = vmatpush1.bf16.msra.mxu0 %v1483
        %1856 = vmatprep.subr.bf16.mxu0 0
        %1857 = vmatpush1.bf16.msra.mxu0 0
        %1858 = vmatprep.subr.bf16.mxu0 0
        %1859 = vmatpush1.bf16.msra.mxu0 0
        %1860 = vmatprep.subr.bf16.mxu0 0
        %1861 = vmatpush1.bf16.msra.mxu0 0
        %1862 = vmatprep.subr.bf16.mxu0 0
        %1863 = vmatpush1.bf16.msra.mxu0 0
        %1864 = vmatprep.subr.bf16.mxu0 0
        %1865 = vmatpush1.bf16.msra.mxu0 0
        %1866 = vmatprep.subr.bf16.mxu0 0
        %1867 = vmatpush1.bf16.msra.mxu0 0
        %1868 = vmatprep.subr.bf16.mxu0 0
        %1869 = vmatpush1.bf16.msra.mxu0 0
        %1870 = vmatprep.subr.bf16.mxu0 0
        %1871 = vmatpush1.bf16.msra.mxu0 0
        %1872 = vmatprep.mubr.bf16.mxu0 0
        %1873 = vmatmul.mubr.bf16.gmra.mrb[0].mxu0 %v583
        %v1874 = vpop.f32.mrb[0].mxu0
        %v1875 = vadd.f32 %v1832, %v1874
        %v1876 = vpop.f32.mrb[0].mxu0
        %v1877 = vadd.f32 %v1834, %v1876
        %v1878 = vpop.f32.mrb[0].mxu0
        %v1879 = vadd.f32 %v1836, %v1878
        %v1880 = vpop.f32.mrb[0].mxu0
        %v1881 = vadd.f32 %v1838, %v1880
        %1882 = vdwg.mxu0
        %1883 = vmatprep.subr.bf16.mxu0 %v1266
        %1884 = vmatpush1.bf16.msra.mxu0 %v1265
        %1885 = vmatprep.subr.bf16.mxu0 %v1270
        %1886 = vmatpush1.bf16.msra.mxu0 %v1269
        %1887 = vmatprep.subr.bf16.mxu0 %v1274
        %1888 = vmatpush1.bf16.msra.mxu0 %v1273
        %1889 = vmatprep.subr.bf16.mxu0 %v1278
        %1890 = vmatpush1.bf16.msra.mxu0 %v1277
        %1891 = vmatprep.subr.bf16.mxu0 %v1282
        %1892 = vmatpush1.bf16.msra.mxu0 %v1281
        %1893 = vmatprep.subr.bf16.mxu0 %v1286
        %1894 = vmatpush1.bf16.msra.mxu0 %v1285
        %1895 = vmatprep.subr.bf16.mxu0 %v1290
        %1896 = vmatpush1.bf16.msra.mxu0 %v1289
        %1897 = vmatprep.subr.bf16.mxu0 %v1294
        %1898 = vmatpush1.bf16.msra.mxu0 %v1293
        %1899 = vmatprep.subr.bf16.mxu0 %v1298
        %1900 = vmatpush1.bf16.msra.mxu0 %v1297
        %1901 = vmatprep.subr.bf16.mxu0 %v1302
        %1902 = vmatpush1.bf16.msra.mxu0 %v1301
        %1903 = vmatprep.subr.bf16.mxu0 %v1306
        %1904 = vmatpush1.bf16.msra.mxu0 %v1305
        %1905 = vmatprep.subr.bf16.mxu0 %v1310
        %1906 = vmatpush1.bf16.msra.mxu0 %v1309
        %1907 = vmatprep.subr.bf16.mxu0 %v1314
        %1908 = vmatpush1.bf16.msra.mxu0 %v1313
        %1909 = vmatprep.subr.bf16.mxu0 %v1318
        %1910 = vmatpush1.bf16.msra.mxu0 %v1317
        %1911 = vmatprep.subr.bf16.mxu0 %v1322
        %1912 = vmatpush1.bf16.msra.mxu0 %v1321
        %1913 = vmatprep.subr.bf16.mxu0 %v1326
        %1914 = vmatpush1.bf16.msra.mxu0 %v1325
        %1915 = vmatprep.mubr.bf16.mxu0 %v578
        %1916 = vmatmul.mubr.bf16.gmra.mrb[0].mxu0 %v577
        %v1917 = vpop.f32.mrb[0].mxu0
        %v1918 = vadd.f32 %v546, %v1917
        %v1919 = vpop.f32.mrb[0].mxu0
        %v1920 = vadd.f32 %v550, %v1919
        %v1921 = vpop.f32.mrb[0].mxu0
        %v1922 = vadd.f32 %v546, %v1921
        %v1923 = vpop.f32.mrb[0].mxu0
        %v1924 = vadd.f32 %v550, %v1923
        %1925 = vdwg.mxu0
        %1926 = vmatprep.subr.bf16.mxu0 %v1330
        %1927 = vmatpush1.bf16.msra.mxu0 %v1329
        %1928 = vmatprep.subr.bf16.mxu0 %v1334
        %1929 = vmatpush1.bf16.msra.mxu0 %v1333
        %1930 = vmatprep.subr.bf16.mxu0 %v1338
        %1931 = vmatpush1.bf16.msra.mxu0 %v1337
        %1932 = vmatprep.subr.bf16.mxu0 %v1342
        %1933 = vmatpush1.bf16.msra.mxu0 %v1341
        %1934 = vmatprep.subr.bf16.mxu0 %v1346
        %1935 = vmatpush1.bf16.msra.mxu0 %v1345
        %1936 = vmatprep.subr.bf16.mxu0 %v1350
        %1937 = vmatpush1.bf16.msra.mxu0 %v1349
        %1938 = vmatprep.subr.bf16.mxu0 %v1354
        %1939 = vmatpush1.bf16.msra.mxu0 %v1353
        %1940 = vmatprep.subr.bf16.mxu0 %v1358
        %1941 = vmatpush1.bf16.msra.mxu0 %v1357
        %1942 = vmatprep.subr.bf16.mxu0 %v1362
        %1943 = vmatpush1.bf16.msra.mxu0 %v1361
        %1944 = vmatprep.subr.bf16.mxu0 %v1366
        %1945 = vmatpush1.bf16.msra.mxu0 %v1365
        %1946 = vmatprep.subr.bf16.mxu0 %v1370
        %1947 = vmatpush1.bf16.msra.mxu0 %v1369
        %1948 = vmatprep.subr.bf16.mxu0 %v1374
        %1949 = vmatpush1.bf16.msra.mxu0 %v1373
        %1950 = vmatprep.subr.bf16.mxu0 %v1378
        %1951 = vmatpush1.bf16.msra.mxu0 %v1377
        %1952 = vmatprep.subr.bf16.mxu0 %v1382
        %1953 = vmatpush1.bf16.msra.mxu0 %v1381
        %1954 = vmatprep.subr.bf16.mxu0 %v1386
        %1955 = vmatpush1.bf16.msra.mxu0 %v1385
        %1956 = vmatprep.subr.bf16.mxu0 %v1390
        %1957 = vmatpush1.bf16.msra.mxu0 %v1389
        %1958 = vmatprep.mubr.bf16.mxu0 %v580
        %1959 = vmatmul.mubr.bf16.gmra.mrb[0].mxu0 %v579
        %v1960 = vpop.f32.mrb[0].mxu0
        %v1961 = vadd.f32 %v1918, %v1960
        %v1962 = vpop.f32.mrb[0].mxu0
        %v1963 = vadd.f32 %v1920, %v1962
        %v1964 = vpop.f32.mrb[0].mxu0
        %v1965 = vadd.f32 %v1922, %v1964
        %v1966 = vpop.f32.mrb[0].mxu0
        %v1967 = vadd.f32 %v1924, %v1966
        %1968 = vdwg.mxu0
        %1969 = vmatprep.subr.bf16.mxu0 %v1394
        %1970 = vmatpush1.bf16.msra.mxu0 %v1393
        %1971 = vmatprep.subr.bf16.mxu0 %v1398
        %1972 = vmatpush1.bf16.msra.mxu0 %v1397
        %1973 = vmatprep.subr.bf16.mxu0 %v1402
        %1974 = vmatpush1.bf16.msra.mxu0 %v1401
        %1975 = vmatprep.subr.bf16.mxu0 %v1406
        %1976 = vmatpush1.bf16.msra.mxu0 %v1405
        %1977 = vmatprep.subr.bf16.mxu0 %v1410
        %1978 = vmatpush1.bf16.msra.mxu0 %v1409
        %1979 = vmatprep.subr.bf16.mxu0 %v1414
        %1980 = vmatpush1.bf16.msra.mxu0 %v1413
        %1981 = vmatprep.subr.bf16.mxu0 %v1418
        %1982 = vmatpush1.bf16.msra.mxu0 %v1417
        %1983 = vmatprep.subr.bf16.mxu0 %v1422
        %1984 = vmatpush1.bf16.msra.mxu0 %v1421
        %1985 = vmatprep.subr.bf16.mxu0 %v1426
        %1986 = vmatpush1.bf16.msra.mxu0 %v1425
        %1987 = vmatprep.subr.bf16.mxu0 %v1430
        %1988 = vmatpush1.bf16.msra.mxu0 %v1429
        %1989 = vmatprep.subr.bf16.mxu0 %v1434
        %1990 = vmatpush1.bf16.msra.mxu0 %v1433
        %1991 = vmatprep.subr.bf16.mxu0 %v1438
        %1992 = vmatpush1.bf16.msra.mxu0 %v1437
        %1993 = vmatprep.subr.bf16.mxu0 %v1442
        %1994 = vmatpush1.bf16.msra.mxu0 %v1441
        %1995 = vmatprep.subr.bf16.mxu0 %v1446
        %1996 = vmatpush1.bf16.msra.mxu0 %v1445
        %1997 = vmatprep.subr.bf16.mxu0 %v1450
        %1998 = vmatpush1.bf16.msra.mxu0 %v1449
        %1999 = vmatprep.subr.bf16.mxu0 %v1454
        %2000 = vmatpush1.bf16.msra.mxu0 %v1453
        %2001 = vmatprep.mubr.bf16.mxu0 %v582
        %2002 = vmatmul.mubr.bf16.gmra.mrb[0].mxu0 %v581
        %v2003 = vpop.f32.mrb[0].mxu0
        %v2004 = vadd.f32 %v1961, %v2003
        %v2005 = vpop.f32.mrb[0].mxu0
        %v2006 = vadd.f32 %v1963, %v2005
        %v2007 = vpop.f32.mrb[0].mxu0
        %v2008 = vadd.f32 %v1965, %v2007
        %v2009 = vpop.f32.mrb[0].mxu0
        %v2010 = vadd.f32 %v1967, %v2009
        %2011 = vdwg.mxu0
        %2012 = vmatprep.subr.bf16.mxu0 %v1458
        %2013 = vmatpush1.bf16.msra.mxu0 %v1457
        %2014 = vmatprep.subr.bf16.mxu0 %v1462
        %2015 = vmatpush1.bf16.msra.mxu0 %v1461
        %2016 = vmatprep.subr.bf16.mxu0 %v1466
        %2017 = vmatpush1.bf16.msra.mxu0 %v1465
        %2018 = vmatprep.subr.bf16.mxu0 %v1470
        %2019 = vmatpush1.bf16.msra.mxu0 %v1469
        %2020 = vmatprep.subr.bf16.mxu0 %v1474
        %2021 = vmatpush1.bf16.msra.mxu0 %v1473
        %2022 = vmatprep.subr.bf16.mxu0 %v1478
        %2023 = vmatpush1.bf16.msra.mxu0 %v1477
        %2024 = vmatprep.subr.bf16.mxu0 %v1482
        %2025 = vmatpush1.bf16.msra.mxu0 %v1481
        %2026 = vmatprep.subr.bf16.mxu0 %v1486
        %2027 = vmatpush1.bf16.msra.mxu0 %v1485
        %2028 = vmatprep.subr.bf16.mxu0 0
        %2029 = vmatpush1.bf16.msra.mxu0 0
        %2030 = vmatprep.subr.bf16.mxu0 0
        %2031 = vmatpush1.bf16.msra.mxu0 0
        %2032 = vmatprep.subr.bf16.mxu0 0
        %2033 = vmatpush1.bf16.msra.mxu0 0
        %2034 = vmatprep.subr.bf16.mxu0 0
        %2035 = vmatpush1.bf16.msra.mxu0 0
        %2036 = vmatprep.subr.bf16.mxu0 0
        %2037 = vmatpush1.bf16.msra.mxu0 0
        %2038 = vmatprep.subr.bf16.mxu0 0
        %2039 = vmatpush1.bf16.msra.mxu0 0
        %2040 = vmatprep.subr.bf16.mxu0 0
        %2041 = vmatpush1.bf16.msra.mxu0 0
        %2042 = vmatprep.subr.bf16.mxu0 0
        %2043 = vmatpush1.bf16.msra.mxu0 0
        %2044 = vmatprep.mubr.bf16.mxu0 0
        %2045 = vmatmul.mubr.bf16.gmra.mrb[0].mxu0 %v583
        %v2046 = vpop.f32.mrb[0].mxu0
        %v2047 = vadd.f32 %v2004, %v2046
        %v2048 = vpop.f32.mrb[0].mxu0
        %v2049 = vadd.f32 %v2006, %v2048
        %v2050 = vpop.f32.mrb[0].mxu0
        %v2051 = vadd.f32 %v2008, %v2050
        %v2052 = vpop.f32.mrb[0].mxu0
        %v2053 = vadd.f32 %v2010, %v2052
        %2054 = vdwg.mxu0
        %v2055 = vmax.f32 %v1875, 0.0
        %v2056 = vmax.f32 %v1877, 0.0
        %v2057 = vmax.f32 %v2047, 0.0
        %v2058 = vmax.f32 %v2049, 0.0
        %v2059 = vmax.f32 %v1879, 0.0
        %v2060 = vmax.f32 %v1881, 0.0
        %v2061 = vmax.f32 %v2051, 0.0
        %v2062 = vmax.f32 %v2053, 0.0
        %v2063 = vpack.c.bf16 %v2059, %v2055
        %v2064 = vpack.c.bf16 %v2060, %v2056
        %v2065 = vpack.c.bf16 %v2061, %v2057
        %v2066 = vpack.c.bf16 %v2062, %v2058
        %v2067 = vld [vmem:[%s3] sm:$0xff]
        %v2068 = vld [vmem:[%s3 + $0x8] sm:$0xff]
        %v2069 = vld [vmem:[%s3 + $0x10] sm:$0xff]
        %v2070 = vld [vmem:[%s3 + $0x18] sm:$0xff]
        %v2071 = vld [vmem:[%s3 + $0x20] sm:$0xff]
        %v2072 = vld [vmem:[%s3 + $0x28] sm:$0xff]
        %v2073 = vld [vmem:[%s3 + $0x30] sm:$0xff]
        %v2074 = vld [vmem:[%s3 + $0x38] sm:$0xff]
        %v2075 = vld [vmem:[%s3 + $0x40] sm:$0xff]
        %v2076 = vld [vmem:[%s3 + $0x48] sm:$0xff]
        %v2077 = vld [vmem:[%s3 + $0x50] sm:$0xff]
        %v2078 = vld [vmem:[%s3 + $0x58] sm:$0xff]
        %v2079 = vld [vmem:[%s3 + $0x60] sm:$0xff]
        %v2080 = vld [vmem:[%s3 + $0x68] sm:$0xff]
        %v2081 = vld [vmem:[%s3 + $0x70] sm:$0xff]
        %v2082 = vld [vmem:[%s3 + $0x78] sm:$0xff]
        %v2083 = vld [vmem:[%s3 + $0x80] sm:$0xff]
        %v2084 = vld [vmem:[%s3 + $0x88] sm:$0xff]
        %v2085 = vld [vmem:[%s3 + $0x90] sm:$0xff]
        %v2086 = vld [vmem:[%s3 + $0x98] sm:$0xff]
        %v2087 = vld [vmem:[%s3 + $0xa0] sm:$0xff]
        %v2088 = vld [vmem:[%s3 + $0xa8] sm:$0xff]
        %v2089 = vld [vmem:[%s3 + $0xb0] sm:$0xff]
        %v2090 = vld [vmem:[%s3 + $0xb8] sm:$0xff]
        %v2091 = vld [vmem:[%s3 + $0xc0] sm:$0xff]
        %v2092 = vld [vmem:[%s3 + $0xc8] sm:$0xff]
        %v2093 = vld [vmem:[%s3 + $0xd0] sm:$0xff]
        %v2094 = vld [vmem:[%s3 + $0xd8] sm:$0xff]
        %v2095 = vld [vmem:[%s3 + $0xe0] sm:$0xff]
        %v2096 = vld [vmem:[%s3 + $0xe8] sm:$0xff]
        %v2097 = vld [vmem:[%s3 + $0xf0] sm:$0xff]
        %v2098 = vld [vmem:[%s3 + $0xf8] sm:$0xff]
        %v2099 = vld [vmem:[%s3 + $0x100] sm:$0xff]
        %v2100 = vld [vmem:[%s3 + $0x108] sm:$0xff]
        %v2101 = vld [vmem:[%s3 + $0x110] sm:$0xff]
        %v2102 = vld [vmem:[%s3 + $0x118] sm:$0xff]
        %v2103 = vld [vmem:[%s3 + $0x120] sm:$0xff]
        %v2104 = vld [vmem:[%s3 + $0x128] sm:$0xff]
        %v2105 = vld [vmem:[%s3 + $0x130] sm:$0xff]
        %v2106 = vld [vmem:[%s3 + $0x138] sm:$0xff]
        %v2107 = vld [vmem:[%s3 + $0x140] sm:$0xff]
        %v2108 = vld [vmem:[%s3 + $0x148] sm:$0xff]
        %v2109 = vld [vmem:[%s3 + $0x150] sm:$0xff]
        %v2110 = vld [vmem:[%s3 + $0x158] sm:$0xff]
        %v2111 = vld [vmem:[%s3 + $0x160] sm:$0xff]
        %v2112 = vld [vmem:[%s3 + $0x168] sm:$0xff]
        %v2113 = vld [vmem:[%s3 + $0x170] sm:$0xff]
        %v2114 = vld [vmem:[%s3 + $0x178] sm:$0xff]
        %v2115 = vld [vmem:[%s3 + $0x180] sm:$0xff]
        %v2116 = vld [vmem:[%s3 + $0x188] sm:$0xff]
        %v2117 = vld [vmem:[%s3 + $0x190] sm:$0xff]
        %v2118 = vld [vmem:[%s3 + $0x198] sm:$0xff]
        %v2119 = vld [vmem:[%s3 + $0x1a0] sm:$0xff]
        %v2120 = vld [vmem:[%s3 + $0x1a8] sm:$0xff]
        %v2121 = vld [vmem:[%s3 + $0x1b0] sm:$0xff]
        %v2122 = vld [vmem:[%s3 + $0x1b8] sm:$0xff]
        %v2123 = vld [vmem:[%s3 + $0x1c0] sm:$0xff]
        %v2124 = vld [vmem:[%s3 + $0x1c8] sm:$0xff]
        %v2125 = vld [vmem:[%s3 + $0x1d0] sm:$0xff]
        %v2126 = vld [vmem:[%s3 + $0x1d8] sm:$0xff]
        %v2127 = vld [vmem:[%s3 + $0x1e0] sm:$0xff]
        %v2128 = vld [vmem:[%s3 + $0x1e8] sm:$0xff]
        %v2129 = vld [vmem:[%s3 + $0x1f0] sm:$0xff]
        %v2130 = vld [vmem:[%s3 + $0x1f8] sm:$0xff]
        %v2131 = vld [vmem:[%s3 + $0x200] sm:$0xff]
        %v2132 = vld [vmem:[%s3 + $0x208] sm:$0xff]
        %v2133 = vld [vmem:[%s3 + $0x210] sm:$0xff]
        %v2134 = vld [vmem:[%s3 + $0x218] sm:$0xff]
        %v2135 = vld [vmem:[%s3 + $0x220] sm:$0xff]
        %v2136 = vld [vmem:[%s3 + $0x228] sm:$0xff]
        %v2137 = vld [vmem:[%s3 + $0x230] sm:$0xff]
        %v2138 = vld [vmem:[%s3 + $0x238] sm:$0xff]
        %v2139 = vld [vmem:[%s3 + $0x240] sm:$0xff]
        %v2140 = vld [vmem:[%s3 + $0x248] sm:$0xff]
        %v2141 = vld [vmem:[%s3 + $0x250] sm:$0xff]
        %v2142 = vld [vmem:[%s3 + $0x258] sm:$0xff]
        %v2143 = vld [vmem:[%s3 + $0x260] sm:$0xff]
        %v2144 = vld [vmem:[%s3 + $0x268] sm:$0xff]
        %v2145 = vld [vmem:[%s3 + $0x270] sm:$0xff]
        %v2146 = vld [vmem:[%s3 + $0x278] sm:$0xff]
        %v2147 = vld [vmem:[%s3 + $0x280] sm:$0xff]
        %v2148 = vld [vmem:[%s3 + $0x288] sm:$0xff]
        %v2149 = vld [vmem:[%s3 + $0x290] sm:$0xff]
        %v2150 = vld [vmem:[%s3 + $0x298] sm:$0xff]
        %v2151 = vld [vmem:[%s3 + $0x2a0] sm:$0xff]
        %v2152 = vld [vmem:[%s3 + $0x2a8] sm:$0xff]
        %v2153 = vld [vmem:[%s3 + $0x2b0] sm:$0xff]
        %v2154 = vld [vmem:[%s3 + $0x2b8] sm:$0xff]
        %v2155 = vld [vmem:[%s3 + $0x2c0] sm:$0xff]
        %v2156 = vld [vmem:[%s3 + $0x2c8] sm:$0xff]
        %v2157 = vld [vmem:[%s3 + $0x2d0] sm:$0xff]
        %v2158 = vld [vmem:[%s3 + $0x2d8] sm:$0xff]
        %v2159 = vld [vmem:[%s3 + $0x2e0] sm:$0xff]
        %v2160 = vld [vmem:[%s3 + $0x2e8] sm:$0xff]
        %v2161 = vld [vmem:[%s3 + $0x2f0] sm:$0xff]
        %v2162 = vld [vmem:[%s3 + $0x2f8] sm:$0xff]
        %v2163 = vld [vmem:[%s3 + $0x300] sm:$0xff]
        %v2164 = vld [vmem:[%s3 + $0x308] sm:$0xff]
        %v2165 = vld [vmem:[%s3 + $0x310] sm:$0xff]
        %v2166 = vld [vmem:[%s3 + $0x318] sm:$0xff]
        %v2167 = vld [vmem:[%s3 + $0x320] sm:$0xff]
        %v2168 = vld [vmem:[%s3 + $0x328] sm:$0xff]
        %v2169 = vld [vmem:[%s3 + $0x330] sm:$0xff]
        %v2170 = vld [vmem:[%s3 + $0x338] sm:$0xff]
        %v2171 = vld [vmem:[%s3 + $0x340] sm:$0xff]
        %v2172 = vld [vmem:[%s3 + $0x348] sm:$0xff]
        %v2173 = vld [vmem:[%s3 + $0x350] sm:$0xff]
        %v2174 = vld [vmem:[%s3 + $0x358] sm:$0xff]
        %v2175 = vld [vmem:[%s3 + $0x360] sm:$0xff]
        %v2176 = vld [vmem:[%s3 + $0x368] sm:$0xff]
        %v2177 = vld [vmem:[%s3 + $0x370] sm:$0xff]
        %v2178 = vld [vmem:[%s3 + $0x378] sm:$0xff]
        %v2179 = vld [vmem:[%s3 + $0x380] sm:$0xff]
        %v2180 = vld [vmem:[%s3 + $0x388] sm:$0xff]
        %v2181 = vld [vmem:[%s3 + $0x390] sm:$0xff]
        %v2182 = vld [vmem:[%s3 + $0x398] sm:$0xff]
        %v2183 = vld [vmem:[%s3 + $0x3a0] sm:$0xff]
        %v2184 = vld [vmem:[%s3 + $0x3a8] sm:$0xff]
        %v2185 = vld [vmem:[%s3 + $0x3b0] sm:$0xff]
        %v2186 = vld [vmem:[%s3 + $0x3b8] sm:$0xff]
        %v2187 = vld [vmem:[%s3 + $0x3c0] sm:$0xff]
        %v2188 = vld [vmem:[%s3 + $0x3c8] sm:$0xff]
        %v2189 = vld [vmem:[%s3 + $0x3d0] sm:$0xff]
        %v2190 = vld [vmem:[%s3 + $0x3d8] sm:$0xff]
        %v2191 = vld [vmem:[%s3 + $0x3e0] sm:$0xff]
        %v2192 = vld [vmem:[%s3 + $0x3e8] sm:$0xff]
        %v2193 = vld [vmem:[%s3 + $0x3f0] sm:$0xff]
        %v2194 = vld [vmem:[%s3 + $0x3f8] sm:$0xff]
        %v2195 = vld [vmem:[%s4] sm:$0xf]
        %v2197 = vlaneseq
        %v2198 = vshrl.u32 %v2197, 7
        %v2199 = vsub.s32 0, %v2198
        %v2200 = vrot.slane %v2195, %v2199
        %v2201 = vlaneseq
        %v2202 = vshrl.u32 %v2201, 7
        %v2203 = vsub.s32 1, %v2202
        %v2204 = vrot.slane %v2195, %v2203
        %v2205 = vlaneseq
        %v2206 = vshrl.u32 %v2205, 7
        %v2207 = vsub.s32 2, %v2206
        %v2208 = vrot.slane %v2195, %v2207
        %v2209 = vlaneseq
        %v2210 = vshrl.u32 %v2209, 7
        %v2211 = vsub.s32 3, %v2210
        %v2212 = vrot.slane %v2195, %v2211
        %v2345 = vunpack.c.l.b16 %v2067
        %v2346 = vunpack.c.h.b16 %v2067
        %v2347 = vunpack.c.l.b16 %v2068
        %v2348 = vunpack.c.h.b16 %v2068
        %v2349 = vunpack.c.l.b16 %v2069
        %v2350 = vunpack.c.h.b16 %v2069
        %v2351 = vunpack.c.l.b16 %v2070
        %v2352 = vunpack.c.h.b16 %v2070
        %v2353 = vunpack.c.l.b16 %v2071
        %v2354 = vunpack.c.h.b16 %v2071
        %v2355 = vunpack.c.l.b16 %v2072
        %v2356 = vunpack.c.h.b16 %v2072
        %v2357 = vunpack.c.l.b16 %v2073
        %v2358 = vunpack.c.h.b16 %v2073
        %v2359 = vunpack.c.l.b16 %v2074
        %v2360 = vunpack.c.h.b16 %v2074
        %v2361 = vunpack.c.l.b16 %v2075
        %v2362 = vunpack.c.h.b16 %v2075
        %v2363 = vunpack.c.l.b16 %v2076
        %v2364 = vunpack.c.h.b16 %v2076
        %v2365 = vunpack.c.l.b16 %v2077
        %v2366 = vunpack.c.h.b16 %v2077
        %v2367 = vunpack.c.l.b16 %v2078
        %v2368 = vunpack.c.h.b16 %v2078
        %v2369 = vunpack.c.l.b16 %v2079
        %v2370 = vunpack.c.h.b16 %v2079
        %v2371 = vunpack.c.l.b16 %v2080
        %v2372 = vunpack.c.h.b16 %v2080
        %v2373 = vunpack.c.l.b16 %v2081
        %v2374 = vunpack.c.h.b16 %v2081
        %v2375 = vunpack.c.l.b16 %v2082
        %v2376 = vunpack.c.h.b16 %v2082
        %v2377 = vunpack.c.l.b16 %v2083
        %v2378 = vunpack.c.h.b16 %v2083
        %v2379 = vunpack.c.l.b16 %v2084
        %v2380 = vunpack.c.h.b16 %v2084
        %v2381 = vunpack.c.l.b16 %v2085
        %v2382 = vunpack.c.h.b16 %v2085
        %v2383 = vunpack.c.l.b16 %v2086
        %v2384 = vunpack.c.h.b16 %v2086
        %v2385 = vunpack.c.l.b16 %v2087
        %v2386 = vunpack.c.h.b16 %v2087
        %v2387 = vunpack.c.l.b16 %v2088
        %v2388 = vunpack.c.h.b16 %v2088
        %v2389 = vunpack.c.l.b16 %v2089
        %v2390 = vunpack.c.h.b16 %v2089
        %v2391 = vunpack.c.l.b16 %v2090
        %v2392 = vunpack.c.h.b16 %v2090
        %v2393 = vunpack.c.l.b16 %v2091
        %v2394 = vunpack.c.h.b16 %v2091
        %v2395 = vunpack.c.l.b16 %v2092
        %v2396 = vunpack.c.h.b16 %v2092
        %v2397 = vunpack.c.l.b16 %v2093
        %v2398 = vunpack.c.h.b16 %v2093
        %v2399 = vunpack.c.l.b16 %v2094
        %v2400 = vunpack.c.h.b16 %v2094
        %v2401 = vunpack.c.l.b16 %v2095
        %v2402 = vunpack.c.h.b16 %v2095
        %v2403 = vunpack.c.l.b16 %v2096
        %v2404 = vunpack.c.h.b16 %v2096
        %v2405 = vunpack.c.l.b16 %v2097
        %v2406 = vunpack.c.h.b16 %v2097
        %v2407 = vunpack.c.l.b16 %v2098
        %v2408 = vunpack.c.h.b16 %v2098
        %v2409 = vunpack.c.l.b16 %v2099
        %v2410 = vunpack.c.h.b16 %v2099
        %v2411 = vunpack.c.l.b16 %v2100
        %v2412 = vunpack.c.h.b16 %v2100
        %v2413 = vunpack.c.l.b16 %v2101
        %v2414 = vunpack.c.h.b16 %v2101
        %v2415 = vunpack.c.l.b16 %v2102
        %v2416 = vunpack.c.h.b16 %v2102
        %v2417 = vunpack.c.l.b16 %v2103
        %v2418 = vunpack.c.h.b16 %v2103
        %v2419 = vunpack.c.l.b16 %v2104
        %v2420 = vunpack.c.h.b16 %v2104
        %v2421 = vunpack.c.l.b16 %v2105
        %v2422 = vunpack.c.h.b16 %v2105
        %v2423 = vunpack.c.l.b16 %v2106
        %v2424 = vunpack.c.h.b16 %v2106
        %v2425 = vunpack.c.l.b16 %v2107
        %v2426 = vunpack.c.h.b16 %v2107
        %v2427 = vunpack.c.l.b16 %v2108
        %v2428 = vunpack.c.h.b16 %v2108
        %v2429 = vunpack.c.l.b16 %v2109
        %v2430 = vunpack.c.h.b16 %v2109
        %v2431 = vunpack.c.l.b16 %v2110
        %v2432 = vunpack.c.h.b16 %v2110
        %v2433 = vunpack.c.l.b16 %v2111
        %v2434 = vunpack.c.h.b16 %v2111
        %v2435 = vunpack.c.l.b16 %v2112
        %v2436 = vunpack.c.h.b16 %v2112
        %v2437 = vunpack.c.l.b16 %v2113
        %v2438 = vunpack.c.h.b16 %v2113
        %v2439 = vunpack.c.l.b16 %v2114
        %v2440 = vunpack.c.h.b16 %v2114
        %v2441 = vunpack.c.l.b16 %v2115
        %v2442 = vunpack.c.h.b16 %v2115
        %v2443 = vunpack.c.l.b16 %v2116
        %v2444 = vunpack.c.h.b16 %v2116
        %v2445 = vunpack.c.l.b16 %v2117
        %v2446 = vunpack.c.h.b16 %v2117
        %v2447 = vunpack.c.l.b16 %v2118
        %v2448 = vunpack.c.h.b16 %v2118
        %v2449 = vunpack.c.l.b16 %v2119
        %v2450 = vunpack.c.h.b16 %v2119
        %v2451 = vunpack.c.l.b16 %v2120
        %v2452 = vunpack.c.h.b16 %v2120
        %v2453 = vunpack.c.l.b16 %v2121
        %v2454 = vunpack.c.h.b16 %v2121
        %v2455 = vunpack.c.l.b16 %v2122
        %v2456 = vunpack.c.h.b16 %v2122
        %v2457 = vunpack.c.l.b16 %v2123
        %v2458 = vunpack.c.h.b16 %v2123
        %v2459 = vunpack.c.l.b16 %v2124
        %v2460 = vunpack.c.h.b16 %v2124
        %v2461 = vunpack.c.l.b16 %v2125
        %v2462 = vunpack.c.h.b16 %v2125
        %v2463 = vunpack.c.l.b16 %v2126
        %v2464 = vunpack.c.h.b16 %v2126
        %v2465 = vunpack.c.l.b16 %v2127
        %v2466 = vunpack.c.h.b16 %v2127
        %v2467 = vunpack.c.l.b16 %v2128
        %v2468 = vunpack.c.h.b16 %v2128
        %v2469 = vunpack.c.l.b16 %v2129
        %v2470 = vunpack.c.h.b16 %v2129
        %v2471 = vunpack.c.l.b16 %v2130
        %v2472 = vunpack.c.h.b16 %v2130
        %v2473 = vunpack.c.l.b16 %v2131
        %v2474 = vunpack.c.h.b16 %v2131
        %v2475 = vunpack.c.l.b16 %v2132
        %v2476 = vunpack.c.h.b16 %v2132
        %v2477 = vunpack.c.l.b16 %v2133
        %v2478 = vunpack.c.h.b16 %v2133
        %v2479 = vunpack.c.l.b16 %v2134
        %v2480 = vunpack.c.h.b16 %v2134
        %v2481 = vunpack.c.l.b16 %v2135
        %v2482 = vunpack.c.h.b16 %v2135
        %v2483 = vunpack.c.l.b16 %v2136
        %v2484 = vunpack.c.h.b16 %v2136
        %v2485 = vunpack.c.l.b16 %v2137
        %v2486 = vunpack.c.h.b16 %v2137
        %v2487 = vunpack.c.l.b16 %v2138
        %v2488 = vunpack.c.h.b16 %v2138
        %v2489 = vunpack.c.l.b16 %v2139
        %v2490 = vunpack.c.h.b16 %v2139
        %v2491 = vunpack.c.l.b16 %v2140
        %v2492 = vunpack.c.h.b16 %v2140
        %v2493 = vunpack.c.l.b16 %v2141
        %v2494 = vunpack.c.h.b16 %v2141
        %v2495 = vunpack.c.l.b16 %v2142
        %v2496 = vunpack.c.h.b16 %v2142
        %v2497 = vunpack.c.l.b16 %v2143
        %v2498 = vunpack.c.h.b16 %v2143
        %v2499 = vunpack.c.l.b16 %v2144
        %v2500 = vunpack.c.h.b16 %v2144
        %v2501 = vunpack.c.l.b16 %v2145
        %v2502 = vunpack.c.h.b16 %v2145
        %v2503 = vunpack.c.l.b16 %v2146
        %v2504 = vunpack.c.h.b16 %v2146
        %v2505 = vunpack.c.l.b16 %v2147
        %v2506 = vunpack.c.h.b16 %v2147
        %v2507 = vunpack.c.l.b16 %v2148
        %v2508 = vunpack.c.h.b16 %v2148
        %v2509 = vunpack.c.l.b16 %v2149
        %v2510 = vunpack.c.h.b16 %v2149
        %v2511 = vunpack.c.l.b16 %v2150
        %v2512 = vunpack.c.h.b16 %v2150
        %v2513 = vunpack.c.l.b16 %v2151
        %v2514 = vunpack.c.h.b16 %v2151
        %v2515 = vunpack.c.l.b16 %v2152
        %v2516 = vunpack.c.h.b16 %v2152
        %v2517 = vunpack.c.l.b16 %v2153
        %v2518 = vunpack.c.h.b16 %v2153
        %v2519 = vunpack.c.l.b16 %v2154
        %v2520 = vunpack.c.h.b16 %v2154
        %v2521 = vunpack.c.l.b16 %v2155
        %v2522 = vunpack.c.h.b16 %v2155
        %v2523 = vunpack.c.l.b16 %v2156
        %v2524 = vunpack.c.h.b16 %v2156
        %v2525 = vunpack.c.l.b16 %v2157
        %v2526 = vunpack.c.h.b16 %v2157
        %v2527 = vunpack.c.l.b16 %v2158
        %v2528 = vunpack.c.h.b16 %v2158
        %v2529 = vunpack.c.l.b16 %v2159
        %v2530 = vunpack.c.h.b16 %v2159
        %v2531 = vunpack.c.l.b16 %v2160
        %v2532 = vunpack.c.h.b16 %v2160
        %v2533 = vunpack.c.l.b16 %v2161
        %v2534 = vunpack.c.h.b16 %v2161
        %v2535 = vunpack.c.l.b16 %v2162
        %v2536 = vunpack.c.h.b16 %v2162
        %v2537 = vunpack.c.l.b16 %v2163
        %v2538 = vunpack.c.h.b16 %v2163
        %v2539 = vunpack.c.l.b16 %v2164
        %v2540 = vunpack.c.h.b16 %v2164
        %v2541 = vunpack.c.l.b16 %v2165
        %v2542 = vunpack.c.h.b16 %v2165
        %v2543 = vunpack.c.l.b16 %v2166
        %v2544 = vunpack.c.h.b16 %v2166
        %v2545 = vunpack.c.l.b16 %v2167
        %v2546 = vunpack.c.h.b16 %v2167
        %v2547 = vunpack.c.l.b16 %v2168
        %v2548 = vunpack.c.h.b16 %v2168
        %v2549 = vunpack.c.l.b16 %v2169
        %v2550 = vunpack.c.h.b16 %v2169
        %v2551 = vunpack.c.l.b16 %v2170
        %v2552 = vunpack.c.h.b16 %v2170
        %v2553 = vunpack.c.l.b16 %v2171
        %v2554 = vunpack.c.h.b16 %v2171
        %v2555 = vunpack.c.l.b16 %v2172
        %v2556 = vunpack.c.h.b16 %v2172
        %v2557 = vunpack.c.l.b16 %v2173
        %v2558 = vunpack.c.h.b16 %v2173
        %v2559 = vunpack.c.l.b16 %v2174
        %v2560 = vunpack.c.h.b16 %v2174
        %v2561 = vunpack.c.l.b16 %v2175
        %v2562 = vunpack.c.h.b16 %v2175
        %v2563 = vunpack.c.l.b16 %v2176
        %v2564 = vunpack.c.h.b16 %v2176
        %v2565 = vunpack.c.l.b16 %v2177
        %v2566 = vunpack.c.h.b16 %v2177
        %v2567 = vunpack.c.l.b16 %v2178
        %v2568 = vunpack.c.h.b16 %v2178
        %v2569 = vunpack.c.l.b16 %v2179
        %v2570 = vunpack.c.h.b16 %v2179
        %v2571 = vunpack.c.l.b16 %v2180
        %v2572 = vunpack.c.h.b16 %v2180
        %v2573 = vunpack.c.l.b16 %v2181
        %v2574 = vunpack.c.h.b16 %v2181
        %v2575 = vunpack.c.l.b16 %v2182
        %v2576 = vunpack.c.h.b16 %v2182
        %v2577 = vunpack.c.l.b16 %v2183
        %v2578 = vunpack.c.h.b16 %v2183
        %v2579 = vunpack.c.l.b16 %v2184
        %v2580 = vunpack.c.h.b16 %v2184
        %v2581 = vunpack.c.l.b16 %v2185
        %v2582 = vunpack.c.h.b16 %v2185
        %v2583 = vunpack.c.l.b16 %v2186
        %v2584 = vunpack.c.h.b16 %v2186
        %v2585 = vunpack.c.l.b16 %v2187
        %v2586 = vunpack.c.h.b16 %v2187
        %v2587 = vunpack.c.l.b16 %v2188
        %v2588 = vunpack.c.h.b16 %v2188
        %v2589 = vunpack.c.l.b16 %v2189
        %v2590 = vunpack.c.h.b16 %v2189
        %v2591 = vunpack.c.l.b16 %v2190
        %v2592 = vunpack.c.h.b16 %v2190
        %v2593 = vunpack.c.l.b16 %v2191
        %v2594 = vunpack.c.h.b16 %v2191
        %v2595 = vunpack.c.l.b16 %v2192
        %v2596 = vunpack.c.h.b16 %v2192
        %v2597 = vunpack.c.l.b16 %v2193
        %v2598 = vunpack.c.h.b16 %v2193
        %v2599 = vunpack.c.l.b16 %v2194
        %v2600 = vunpack.c.h.b16 %v2194
        %v2601 = vpack.c.b16 %v2349, %v2345
        %v2602 = vpack.c.b16 %v2350, %v2346
        %v2603 = vpack.c.b16 %v2351, %v2347
        %v2604 = vpack.c.b16 %v2352, %v2348
        %v2605 = vpack.c.b16 %v2357, %v2353
        %v2606 = vpack.c.b16 %v2358, %v2354
        %v2607 = vpack.c.b16 %v2359, %v2355
        %v2608 = vpack.c.b16 %v2360, %v2356
        %v2609 = vpack.c.b16 %v2365, %v2361
        %v2610 = vpack.c.b16 %v2366, %v2362
        %v2611 = vpack.c.b16 %v2367, %v2363
        %v2612 = vpack.c.b16 %v2368, %v2364
        %v2613 = vpack.c.b16 %v2373, %v2369
        %v2614 = vpack.c.b16 %v2374, %v2370
        %v2615 = vpack.c.b16 %v2375, %v2371
        %v2616 = vpack.c.b16 %v2376, %v2372
        %v2617 = vpack.c.b16 %v2381, %v2377
        %v2618 = vpack.c.b16 %v2382, %v2378
        %v2619 = vpack.c.b16 %v2383, %v2379
        %v2620 = vpack.c.b16 %v2384, %v2380
        %v2621 = vpack.c.b16 %v2389, %v2385
        %v2622 = vpack.c.b16 %v2390, %v2386
        %v2623 = vpack.c.b16 %v2391, %v2387
        %v2624 = vpack.c.b16 %v2392, %v2388
        %v2625 = vpack.c.b16 %v2397, %v2393
        %v2626 = vpack.c.b16 %v2398, %v2394
        %v2627 = vpack.c.b16 %v2399, %v2395
        %v2628 = vpack.c.b16 %v2400, %v2396
        %v2629 = vpack.c.b16 %v2405, %v2401
        %v2630 = vpack.c.b16 %v2406, %v2402
        %v2631 = vpack.c.b16 %v2407, %v2403
        %v2632 = vpack.c.b16 %v2408, %v2404
        %v2633 = vpack.c.b16 %v2413, %v2409
        %v2634 = vpack.c.b16 %v2414, %v2410
        %v2635 = vpack.c.b16 %v2415, %v2411
        %v2636 = vpack.c.b16 %v2416, %v2412
        %v2637 = vpack.c.b16 %v2421, %v2417
        %v2638 = vpack.c.b16 %v2422, %v2418
        %v2639 = vpack.c.b16 %v2423, %v2419
        %v2640 = vpack.c.b16 %v2424, %v2420
        %v2641 = vpack.c.b16 %v2429, %v2425
        %v2642 = vpack.c.b16 %v2430, %v2426
        %v2643 = vpack.c.b16 %v2431, %v2427
        %v2644 = vpack.c.b16 %v2432, %v2428
        %v2645 = vpack.c.b16 %v2437, %v2433
        %v2646 = vpack.c.b16 %v2438, %v2434
        %v2647 = vpack.c.b16 %v2439, %v2435
        %v2648 = vpack.c.b16 %v2440, %v2436
        %v2649 = vpack.c.b16 %v2445, %v2441
        %v2650 = vpack.c.b16 %v2446, %v2442
        %v2651 = vpack.c.b16 %v2447, %v2443
        %v2652 = vpack.c.b16 %v2448, %v2444
        %v2653 = vpack.c.b16 %v2453, %v2449
        %v2654 = vpack.c.b16 %v2454, %v2450
        %v2655 = vpack.c.b16 %v2455, %v2451
        %v2656 = vpack.c.b16 %v2456, %v2452
        %v2657 = vpack.c.b16 %v2461, %v2457
        %v2658 = vpack.c.b16 %v2462, %v2458
        %v2659 = vpack.c.b16 %v2463, %v2459
        %v2660 = vpack.c.b16 %v2464, %v2460
        %v2661 = vpack.c.b16 %v2469, %v2465
        %v2662 = vpack.c.b16 %v2470, %v2466
        %v2663 = vpack.c.b16 %v2471, %v2467
        %v2664 = vpack.c.b16 %v2472, %v2468
        %v2665 = vpack.c.b16 %v2477, %v2473
        %v2666 = vpack.c.b16 %v2478, %v2474
        %v2667 = vpack.c.b16 %v2479, %v2475
        %v2668 = vpack.c.b16 %v2480, %v2476
        %v2669 = vpack.c.b16 %v2485, %v2481
        %v2670 = vpack.c.b16 %v2486, %v2482
        %v2671 = vpack.c.b16 %v2487, %v2483
        %v2672 = vpack.c.b16 %v2488, %v2484
        %v2673 = vpack.c.b16 %v2493, %v2489
        %v2674 = vpack.c.b16 %v2494, %v2490
        %v2675 = vpack.c.b16 %v2495, %v2491
        %v2676 = vpack.c.b16 %v2496, %v2492
        %v2677 = vpack.c.b16 %v2501, %v2497
        %v2678 = vpack.c.b16 %v2502, %v2498
        %v2679 = vpack.c.b16 %v2503, %v2499
        %v2680 = vpack.c.b16 %v2504, %v2500
        %v2681 = vpack.c.b16 %v2509, %v2505
        %v2682 = vpack.c.b16 %v2510, %v2506
        %v2683 = vpack.c.b16 %v2511, %v2507
        %v2684 = vpack.c.b16 %v2512, %v2508
        %v2685 = vpack.c.b16 %v2517, %v2513
        %v2686 = vpack.c.b16 %v2518, %v2514
        %v2687 = vpack.c.b16 %v2519, %v2515
        %v2688 = vpack.c.b16 %v2520, %v2516
        %v2689 = vpack.c.b16 %v2525, %v2521
        %v2690 = vpack.c.b16 %v2526, %v2522
        %v2691 = vpack.c.b16 %v2527, %v2523
        %v2692 = vpack.c.b16 %v2528, %v2524
        %v2693 = vpack.c.b16 %v2533, %v2529
        %v2694 = vpack.c.b16 %v2534, %v2530
        %v2695 = vpack.c.b16 %v2535, %v2531
        %v2696 = vpack.c.b16 %v2536, %v2532
        %v2697 = vpack.c.b16 %v2541, %v2537
        %v2698 = vpack.c.b16 %v2542, %v2538
        %v2699 = vpack.c.b16 %v2543, %v2539
        %v2700 = vpack.c.b16 %v2544, %v2540
        %v2701 = vpack.c.b16 %v2549, %v2545
        %v2702 = vpack.c.b16 %v2550, %v2546
        %v2703 = vpack.c.b16 %v2551, %v2547
        %v2704 = vpack.c.b16 %v2552, %v2548
        %v2705 = vpack.c.b16 %v2557, %v2553
        %v2706 = vpack.c.b16 %v2558, %v2554
        %v2707 = vpack.c.b16 %v2559, %v2555
        %v2708 = vpack.c.b16 %v2560, %v2556
        %v2709 = vpack.c.b16 %v2565, %v2561
        %v2710 = vpack.c.b16 %v2566, %v2562
        %v2711 = vpack.c.b16 %v2567, %v2563
        %v2712 = vpack.c.b16 %v2568, %v2564
        %v2713 = vpack.c.b16 %v2573, %v2569
        %v2714 = vpack.c.b16 %v2574, %v2570
        %v2715 = vpack.c.b16 %v2575, %v2571
        %v2716 = vpack.c.b16 %v2576, %v2572
        %v2717 = vpack.c.b16 %v2581, %v2577
        %v2718 = vpack.c.b16 %v2582, %v2578
        %v2719 = vpack.c.b16 %v2583, %v2579
        %v2720 = vpack.c.b16 %v2584, %v2580
        %v2721 = vpack.c.b16 %v2589, %v2585
        %v2722 = vpack.c.b16 %v2590, %v2586
        %v2723 = vpack.c.b16 %v2591, %v2587
        %v2724 = vpack.c.b16 %v2592, %v2588
        %v2725 = vpack.c.b16 %v2597, %v2593
        %v2726 = vpack.c.b16 %v2598, %v2594
        %v2727 = vpack.c.b16 %v2599, %v2595
        %v2728 = vpack.c.b16 %v2600, %v2596
        %2857 = vmatprep.subr.bf16.mxu0 %v2602
        %2858 = vmatpush1.bf16.msra.mxu0 %v2601
        %2859 = vmatprep.subr.bf16.mxu0 %v2606
        %2860 = vmatpush1.bf16.msra.mxu0 %v2605
        %2861 = vmatprep.subr.bf16.mxu0 %v2610
        %2862 = vmatpush1.bf16.msra.mxu0 %v2609
        %2863 = vmatprep.subr.bf16.mxu0 %v2614
        %2864 = vmatpush1.bf16.msra.mxu0 %v2613
        %2865 = vmatprep.subr.bf16.mxu0 %v2618
        %2866 = vmatpush1.bf16.msra.mxu0 %v2617
        %2867 = vmatprep.subr.bf16.mxu0 %v2622
        %2868 = vmatpush1.bf16.msra.mxu0 %v2621
        %2869 = vmatprep.subr.bf16.mxu0 %v2626
        %2870 = vmatpush1.bf16.msra.mxu0 %v2625
        %2871 = vmatprep.subr.bf16.mxu0 %v2630
        %2872 = vmatpush1.bf16.msra.mxu0 %v2629
        %2873 = vmatprep.subr.bf16.mxu0 %v2634
        %2874 = vmatpush1.bf16.msra.mxu0 %v2633
        %2875 = vmatprep.subr.bf16.mxu0 %v2638
        %2876 = vmatpush1.bf16.msra.mxu0 %v2637
        %2877 = vmatprep.subr.bf16.mxu0 %v2642
        %2878 = vmatpush1.bf16.msra.mxu0 %v2641
        %2879 = vmatprep.subr.bf16.mxu0 %v2646
        %2880 = vmatpush1.bf16.msra.mxu0 %v2645
        %2881 = vmatprep.subr.bf16.mxu0 %v2650
        %2882 = vmatpush1.bf16.msra.mxu0 %v2649
        %2883 = vmatprep.subr.bf16.mxu0 %v2654
        %2884 = vmatpush1.bf16.msra.mxu0 %v2653
        %2885 = vmatprep.subr.bf16.mxu0 %v2658
        %2886 = vmatpush1.bf16.msra.mxu0 %v2657
        %2887 = vmatprep.subr.bf16.mxu0 %v2662
        %2888 = vmatpush1.bf16.msra.mxu0 %v2661
        %2889 = vmatprep.mubr.bf16.mxu0 %v2064
        %2890 = vmatmul.mubr.bf16.gmra.mrb[0].mxu0 %v2063
        %v2891 = vpop.f32.mrb[0].mxu0
        %v2892 = vadd.f32 %v2200, %v2891
        %v2893 = vpop.f32.mrb[0].mxu0
        %v2894 = vadd.f32 %v2204, %v2893
        %v2895 = vpop.f32.mrb[0].mxu0
        %v2896 = vadd.f32 %v2200, %v2895
        %v2897 = vpop.f32.mrb[0].mxu0
        %v2898 = vadd.f32 %v2204, %v2897
        %2899 = vdwg.mxu0
        %2900 = vmatprep.subr.bf16.mxu0 %v2666
        %2901 = vmatpush1.bf16.msra.mxu0 %v2665
        %2902 = vmatprep.subr.bf16.mxu0 %v2670
        %2903 = vmatpush1.bf16.msra.mxu0 %v2669
        %2904 = vmatprep.subr.bf16.mxu0 %v2674
        %2905 = vmatpush1.bf16.msra.mxu0 %v2673
        %2906 = vmatprep.subr.bf16.mxu0 %v2678
        %2907 = vmatpush1.bf16.msra.mxu0 %v2677
        %2908 = vmatprep.subr.bf16.mxu0 %v2682
        %2909 = vmatpush1.bf16.msra.mxu0 %v2681
        %2910 = vmatprep.subr.bf16.mxu0 %v2686
        %2911 = vmatpush1.bf16.msra.mxu0 %v2685
        %2912 = vmatprep.subr.bf16.mxu0 %v2690
        %2913 = vmatpush1.bf16.msra.mxu0 %v2689
        %2914 = vmatprep.subr.bf16.mxu0 %v2694
        %2915 = vmatpush1.bf16.msra.mxu0 %v2693
        %2916 = vmatprep.subr.bf16.mxu0 %v2698
        %2917 = vmatpush1.bf16.msra.mxu0 %v2697
        %2918 = vmatprep.subr.bf16.mxu0 %v2702
        %2919 = vmatpush1.bf16.msra.mxu0 %v2701
        %2920 = vmatprep.subr.bf16.mxu0 %v2706
        %2921 = vmatpush1.bf16.msra.mxu0 %v2705
        %2922 = vmatprep.subr.bf16.mxu0 %v2710
        %2923 = vmatpush1.bf16.msra.mxu0 %v2709
        %2924 = vmatprep.subr.bf16.mxu0 %v2714
        %2925 = vmatpush1.bf16.msra.mxu0 %v2713
        %2926 = vmatprep.subr.bf16.mxu0 %v2718
        %2927 = vmatpush1.bf16.msra.mxu0 %v2717
        %2928 = vmatprep.subr.bf16.mxu0 %v2722
        %2929 = vmatpush1.bf16.msra.mxu0 %v2721
        %2930 = vmatprep.subr.bf16.mxu0 %v2726
        %2931 = vmatpush1.bf16.msra.mxu0 %v2725
        %2932 = vmatprep.mubr.bf16.mxu0 %v2066
        %2933 = vmatmul.mubr.bf16.gmra.mrb[0].mxu0 %v2065
        %v2934 = vpop.f32.mrb[0].mxu0
        %v2935 = vadd.f32 %v2892, %v2934
        %v2936 = vpop.f32.mrb[0].mxu0
        %v2937 = vadd.f32 %v2894, %v2936
        %v2938 = vpop.f32.mrb[0].mxu0
        %v2939 = vadd.f32 %v2896, %v2938
        %v2940 = vpop.f32.mrb[0].mxu0
        %v2941 = vadd.f32 %v2898, %v2940
        %2942 = vdwg.mxu0
        %2943 = vmatprep.subr.bf16.mxu0 %v2604
        %2944 = vmatpush1.bf16.msra.mxu0 %v2603
        %2945 = vmatprep.subr.bf16.mxu0 %v2608
        %2946 = vmatpush1.bf16.msra.mxu0 %v2607
        %2947 = vmatprep.subr.bf16.mxu0 %v2612
        %2948 = vmatpush1.bf16.msra.mxu0 %v2611
        %2949 = vmatprep.subr.bf16.mxu0 %v2616
        %2950 = vmatpush1.bf16.msra.mxu0 %v2615
        %2951 = vmatprep.subr.bf16.mxu0 %v2620
        %2952 = vmatpush1.bf16.msra.mxu0 %v2619
        %2953 = vmatprep.subr.bf16.mxu0 %v2624
        %2954 = vmatpush1.bf16.msra.mxu0 %v2623
        %2955 = vmatprep.subr.bf16.mxu0 %v2628
        %2956 = vmatpush1.bf16.msra.mxu0 %v2627
        %2957 = vmatprep.subr.bf16.mxu0 %v2632
        %2958 = vmatpush1.bf16.msra.mxu0 %v2631
        %2959 = vmatprep.subr.bf16.mxu0 %v2636
        %2960 = vmatpush1.bf16.msra.mxu0 %v2635
        %2961 = vmatprep.subr.bf16.mxu0 %v2640
        %2962 = vmatpush1.bf16.msra.mxu0 %v2639
        %2963 = vmatprep.subr.bf16.mxu0 %v2644
        %2964 = vmatpush1.bf16.msra.mxu0 %v2643
        %2965 = vmatprep.subr.bf16.mxu0 %v2648
        %2966 = vmatpush1.bf16.msra.mxu0 %v2647
        %2967 = vmatprep.subr.bf16.mxu0 %v2652
        %2968 = vmatpush1.bf16.msra.mxu0 %v2651
        %2969 = vmatprep.subr.bf16.mxu0 %v2656
        %2970 = vmatpush1.bf16.msra.mxu0 %v2655
        %2971 = vmatprep.subr.bf16.mxu0 %v2660
        %2972 = vmatpush1.bf16.msra.mxu0 %v2659
        %2973 = vmatprep.subr.bf16.mxu0 %v2664
        %2974 = vmatpush1.bf16.msra.mxu0 %v2663
        %2975 = vmatprep.mubr.bf16.mxu0 %v2064
        %2976 = vmatmul.mubr.bf16.gmra.mrb[0].mxu0 %v2063
        %v2977 = vpop.f32.mrb[0].mxu0
        %v2978 = vadd.f32 %v2208, %v2977
        %v2979 = vpop.f32.mrb[0].mxu0
        %v2980 = vadd.f32 %v2212, %v2979
        %v2981 = vpop.f32.mrb[0].mxu0
        %v2982 = vadd.f32 %v2208, %v2981
        %v2983 = vpop.f32.mrb[0].mxu0
        %v2984 = vadd.f32 %v2212, %v2983
        %2985 = vdwg.mxu0
        %2986 = vmatprep.subr.bf16.mxu0 %v2668
        %2987 = vmatpush1.bf16.msra.mxu0 %v2667
        %2988 = vmatprep.subr.bf16.mxu0 %v2672
        %2989 = vmatpush1.bf16.msra.mxu0 %v2671
        %2990 = vmatprep.subr.bf16.mxu0 %v2676
        %2991 = vmatpush1.bf16.msra.mxu0 %v2675
        %2992 = vmatprep.subr.bf16.mxu0 %v2680
        %2993 = vmatpush1.bf16.msra.mxu0 %v2679
        %2994 = vmatprep.subr.bf16.mxu0 %v2684
        %2995 = vmatpush1.bf16.msra.mxu0 %v2683
        %2996 = vmatprep.subr.bf16.mxu0 %v2688
        %2997 = vmatpush1.bf16.msra.mxu0 %v2687
        %2998 = vmatprep.subr.bf16.mxu0 %v2692
        %2999 = vmatpush1.bf16.msra.mxu0 %v2691
        %3000 = vmatprep.subr.bf16.mxu0 %v2696
        %3001 = vmatpush1.bf16.msra.mxu0 %v2695
        %3002 = vmatprep.subr.bf16.mxu0 %v2700
        %3003 = vmatpush1.bf16.msra.mxu0 %v2699
        %3004 = vmatprep.subr.bf16.mxu0 %v2704
        %3005 = vmatpush1.bf16.msra.mxu0 %v2703
        %3006 = vmatprep.subr.bf16.mxu0 %v2708
        %3007 = vmatpush1.bf16.msra.mxu0 %v2707
        %3008 = vmatprep.subr.bf16.mxu0 %v2712
        %3009 = vmatpush1.bf16.msra.mxu0 %v2711
        %3010 = vmatprep.subr.bf16.mxu0 %v2716
        %3011 = vmatpush1.bf16.msra.mxu0 %v2715
        %3012 = vmatprep.subr.bf16.mxu0 %v2720
        %3013 = vmatpush1.bf16.msra.mxu0 %v2719
        %3014 = vmatprep.subr.bf16.mxu0 %v2724
        %3015 = vmatpush1.bf16.msra.mxu0 %v2723
        %3016 = vmatprep.subr.bf16.mxu0 %v2728
        %3017 = vmatpush1.bf16.msra.mxu0 %v2727
        %3018 = vmatprep.mubr.bf16.mxu0 %v2066
        %3019 = vmatmul.mubr.bf16.gmra.mrb[0].mxu0 %v2065
        %v3020 = vpop.f32.mrb[0].mxu0
        %v3021 = vadd.f32 %v2978, %v3020
        %v3022 = vpop.f32.mrb[0].mxu0
        %v3023 = vadd.f32 %v2980, %v3022
        %v3024 = vpop.f32.mrb[0].mxu0
        %v3025 = vadd.f32 %v2982, %v3024
        %v3026 = vpop.f32.mrb[0].mxu0
        %v3027 = vadd.f32 %v2984, %v3026
        %3028 = vdwg.mxu0
        %v3029 = vmax.f32 %v2935, 0.0
        %v3030 = vmax.f32 %v2937, 0.0
        %v3031 = vmax.f32 %v3021, 0.0
        %v3032 = vmax.f32 %v3023, 0.0
        %v3033 = vmax.f32 %v2939, 0.0
        %v3034 = vmax.f32 %v2941, 0.0
        %v3035 = vmax.f32 %v3025, 0.0
        %v3036 = vmax.f32 %v3027, 0.0
        %v3037 = vpack.c.bf16 %v3033, %v3029
        %v3038 = vpack.c.bf16 %v3034, %v3030
        %v3039 = vpack.c.bf16 %v3035, %v3031
        %v3040 = vpack.c.bf16 %v3036, %v3032
        %v3041 = vld [vmem:[%s5] sm:$0xf]
        %v3042 = vld [vmem:[%s5 + $0x4] sm:$0xf]
        %v3043 = vld [vmem:[%s5 + $0x8] sm:$0xf]
        %v3044 = vld [vmem:[%s5 + $0xc] sm:$0xf]
        %v3045 = vld [vmem:[%s5 + $0x10] sm:$0xf]
        %v3046 = vld [vmem:[%s5 + $0x14] sm:$0xf]
        %v3047 = vld [vmem:[%s5 + $0x18] sm:$0xf]
        %v3048 = vld [vmem:[%s5 + $0x1c] sm:$0xf]
        %v3049 = vld [vmem:[%s5 + $0x20] sm:$0xf]
        %v3050 = vld [vmem:[%s5 + $0x24] sm:$0xf]
        %v3051 = vld [vmem:[%s5 + $0x28] sm:$0xf]
        %v3052 = vld [vmem:[%s5 + $0x2c] sm:$0xf]
        %v3053 = vld [vmem:[%s5 + $0x30] sm:$0xf]
        %v3054 = vld [vmem:[%s5 + $0x34] sm:$0xf]
        %v3055 = vld [vmem:[%s5 + $0x38] sm:$0xf]
        %v3056 = vld [vmem:[%s5 + $0x3c] sm:$0xf]
        %v3057 = vld [vmem:[%s5 + $0x40] sm:$0xf]
        %v3058 = vld [vmem:[%s5 + $0x44] sm:$0xf]
        %v3059 = vld [vmem:[%s5 + $0x48] sm:$0xf]
        %v3060 = vld [vmem:[%s5 + $0x4c] sm:$0xf]
        %v3061 = vld [vmem:[%s5 + $0x50] sm:$0xf]
        %v3062 = vld [vmem:[%s5 + $0x54] sm:$0xf]
        %v3063 = vld [vmem:[%s5 + $0x58] sm:$0xf]
        %v3064 = vld [vmem:[%s5 + $0x5c] sm:$0xf]
        %v3065 = vld [vmem:[%s5 + $0x60] sm:$0xf]
        %v3066 = vld [vmem:[%s5 + $0x64] sm:$0xf]
        %v3067 = vld [vmem:[%s5 + $0x68] sm:$0xf]
        %v3068 = vld [vmem:[%s5 + $0x6c] sm:$0xf]
        %v3069 = vld [vmem:[%s5 + $0x70] sm:$0xf]
        %v3070 = vld [vmem:[%s5 + $0x74] sm:$0xf]
        %v3071 = vld [vmem:[%s5 + $0x78] sm:$0xf]
        %v3072 = vld [vmem:[%s5 + $0x7c] sm:$0xf]
        %v3073 = vld [vmem:[%s5 + $0x80] sm:$0xf]
        %v3074 = vld [vmem:[%s5 + $0x84] sm:$0xf]
        %v3075 = vld [vmem:[%s5 + $0x88] sm:$0xf]
        %v3076 = vld [vmem:[%s5 + $0x8c] sm:$0xf]
        %v3077 = vld [vmem:[%s5 + $0x90] sm:$0xf]
        %v3078 = vld [vmem:[%s5 + $0x94] sm:$0xf]
        %v3079 = vld [vmem:[%s5 + $0x98] sm:$0xf]
        %v3080 = vld [vmem:[%s5 + $0x9c] sm:$0xf]
        %v3081 = vld [vmem:[%s5 + $0xa0] sm:$0xf]
        %v3082 = vld [vmem:[%s5 + $0xa4] sm:$0xf]
        %v3083 = vld [vmem:[%s5 + $0xa8] sm:$0xf]
        %v3084 = vld [vmem:[%s5 + $0xac] sm:$0xf]
        %v3085 = vld [vmem:[%s5 + $0xb0] sm:$0xf]
        %v3086 = vld [vmem:[%s5 + $0xb4] sm:$0xf]
        %v3087 = vld [vmem:[%s5 + $0xb8] sm:$0xf]
        %v3088 = vld [vmem:[%s5 + $0xbc] sm:$0xf]
        %v3089 = vld [vmem:[%s5 + $0xc0] sm:$0xf]
        %v3090 = vld [vmem:[%s5 + $0xc4] sm:$0xf]
        %v3091 = vld [vmem:[%s5 + $0xc8] sm:$0xf]
        %v3092 = vld [vmem:[%s5 + $0xcc] sm:$0xf]
        %v3093 = vld [vmem:[%s5 + $0xd0] sm:$0xf]
        %v3094 = vld [vmem:[%s5 + $0xd4] sm:$0xf]
        %v3095 = vld [vmem:[%s5 + $0xd8] sm:$0xf]
        %v3096 = vld [vmem:[%s5 + $0xdc] sm:$0xf]
        %v3097 = vld [vmem:[%s5 + $0xe0] sm:$0xf]
        %v3098 = vld [vmem:[%s5 + $0xe4] sm:$0xf]
        %v3099 = vld [vmem:[%s5 + $0xe8] sm:$0xf]
        %v3100 = vld [vmem:[%s5 + $0xec] sm:$0xf]
        %v3101 = vld [vmem:[%s5 + $0xf0] sm:$0xf]
        %v3102 = vld [vmem:[%s5 + $0xf4] sm:$0xf]
        %v3103 = vld [vmem:[%s5 + $0xf8] sm:$0xf]
        %v3104 = vld [vmem:[%s5 + $0xfc] sm:$0xf]
        %v3105 = vld [vmem:[%s6] sm:$0x1]
        %v3107 = vlaneseq
        %v3108 = vshrl.u32 %v3107, 7
        %v3109 = vsub.s32 0, %v3108
        %v3110 = vrot.slane %v3105, %v3109
        %v3176 = vunpack.c.l.b16 %v3041
        %v3177 = vunpack.c.l.b16 %v3042
        %v3178 = vunpack.c.l.b16 %v3043
        %v3179 = vunpack.c.l.b16 %v3044
        %v3180 = vunpack.c.l.b16 %v3045
        %v3181 = vunpack.c.l.b16 %v3046
        %v3182 = vunpack.c.l.b16 %v3047
        %v3183 = vunpack.c.l.b16 %v3048
        %v3184 = vunpack.c.l.b16 %v3049
        %v3185 = vunpack.c.l.b16 %v3050
        %v3186 = vunpack.c.l.b16 %v3051
        %v3187 = vunpack.c.l.b16 %v3052
        %v3188 = vunpack.c.l.b16 %v3053
        %v3189 = vunpack.c.l.b16 %v3054
        %v3190 = vunpack.c.l.b16 %v3055
        %v3191 = vunpack.c.l.b16 %v3056
        %v3192 = vunpack.c.l.b16 %v3057
        %v3193 = vunpack.c.l.b16 %v3058
        %v3194 = vunpack.c.l.b16 %v3059
        %v3195 = vunpack.c.l.b16 %v3060
        %v3196 = vunpack.c.l.b16 %v3061
        %v3197 = vunpack.c.l.b16 %v3062
        %v3198 = vunpack.c.l.b16 %v3063
        %v3199 = vunpack.c.l.b16 %v3064
        %v3200 = vunpack.c.l.b16 %v3065
        %v3201 = vunpack.c.l.b16 %v3066
        %v3202 = vunpack.c.l.b16 %v3067
        %v3203 = vunpack.c.l.b16 %v3068
        %v3204 = vunpack.c.l.b16 %v3069
        %v3205 = vunpack.c.l.b16 %v3070
        %v3206 = vunpack.c.l.b16 %v3071
        %v3207 = vunpack.c.l.b16 %v3072
        %v3208 = vunpack.c.l.b16 %v3073
        %v3209 = vunpack.c.l.b16 %v3074
        %v3210 = vunpack.c.l.b16 %v3075
        %v3211 = vunpack.c.l.b16 %v3076
        %v3212 = vunpack.c.l.b16 %v3077
        %v3213 = vunpack.c.l.b16 %v3078
        %v3214 = vunpack.c.l.b16 %v3079
        %v3215 = vunpack.c.l.b16 %v3080
        %v3216 = vunpack.c.l.b16 %v3081
        %v3217 = vunpack.c.l.b16 %v3082
        %v3218 = vunpack.c.l.b16 %v3083
        %v3219 = vunpack.c.l.b16 %v3084
        %v3220 = vunpack.c.l.b16 %v3085
        %v3221 = vunpack.c.l.b16 %v3086
        %v3222 = vunpack.c.l.b16 %v3087
        %v3223 = vunpack.c.l.b16 %v3088
        %v3224 = vunpack.c.l.b16 %v3089
        %v3225 = vunpack.c.l.b16 %v3090
        %v3226 = vunpack.c.l.b16 %v3091
        %v3227 = vunpack.c.l.b16 %v3092
        %v3228 = vunpack.c.l.b16 %v3093
        %v3229 = vunpack.c.l.b16 %v3094
        %v3230 = vunpack.c.l.b16 %v3095
        %v3231 = vunpack.c.l.b16 %v3096
        %v3232 = vunpack.c.l.b16 %v3097
        %v3233 = vunpack.c.l.b16 %v3098
        %v3234 = vunpack.c.l.b16 %v3099
        %v3235 = vunpack.c.l.b16 %v3100
        %v3236 = vunpack.c.l.b16 %v3101
        %v3237 = vunpack.c.l.b16 %v3102
        %v3238 = vunpack.c.l.b16 %v3103
        %v3239 = vunpack.c.l.b16 %v3104
        %v3240 = vpack.c.b16 %v3177, %v3176
        %v3241 = vpack.c.b16 %v3179, %v3178
        %v3242 = vpack.c.b16 %v3181, %v3180
        %v3243 = vpack.c.b16 %v3183, %v3182
        %v3244 = vpack.c.b16 %v3185, %v3184
        %v3245 = vpack.c.b16 %v3187, %v3186
        %v3246 = vpack.c.b16 %v3189, %v3188
        %v3247 = vpack.c.b16 %v3191, %v3190
        %v3248 = vpack.c.b16 %v3193, %v3192
        %v3249 = vpack.c.b16 %v3195, %v3194
        %v3250 = vpack.c.b16 %v3197, %v3196
        %v3251 = vpack.c.b16 %v3199, %v3198
        %v3252 = vpack.c.b16 %v3201, %v3200
        %v3253 = vpack.c.b16 %v3203, %v3202
        %v3254 = vpack.c.b16 %v3205, %v3204
        %v3255 = vpack.c.b16 %v3207, %v3206
        %v3256 = vpack.c.b16 %v3209, %v3208
        %v3257 = vpack.c.b16 %v3211, %v3210
        %v3258 = vpack.c.b16 %v3213, %v3212
        %v3259 = vpack.c.b16 %v3215, %v3214
        %v3260 = vpack.c.b16 %v3217, %v3216
        %v3261 = vpack.c.b16 %v3219, %v3218
        %v3262 = vpack.c.b16 %v3221, %v3220
        %v3263 = vpack.c.b16 %v3223, %v3222
        %v3264 = vpack.c.b16 %v3225, %v3224
        %v3265 = vpack.c.b16 %v3227, %v3226
        %v3266 = vpack.c.b16 %v3229, %v3228
        %v3267 = vpack.c.b16 %v3231, %v3230
        %v3268 = vpack.c.b16 %v3233, %v3232
        %v3269 = vpack.c.b16 %v3235, %v3234
        %v3270 = vpack.c.b16 %v3237, %v3236
        %v3271 = vpack.c.b16 %v3239, %v3238
        %3304 = vmatprep.subr.bf16.mxu0 0
        %3305 = vmatpush1.bf16.msra.mxu0 %v3240
        %3306 = vmatprep.subr.bf16.mxu0 0
        %3307 = vmatpush1.bf16.msra.mxu0 %v3241
        %3308 = vmatprep.subr.bf16.mxu0 0
        %3309 = vmatpush1.bf16.msra.mxu0 %v3242
        %3310 = vmatprep.subr.bf16.mxu0 0
        %3311 = vmatpush1.bf16.msra.mxu0 %v3243
        %3312 = vmatprep.subr.bf16.mxu0 0
        %3313 = vmatpush1.bf16.msra.mxu0 %v3244
        %3314 = vmatprep.subr.bf16.mxu0 0
        %3315 = vmatpush1.bf16.msra.mxu0 %v3245
        %3316 = vmatprep.subr.bf16.mxu0 0
        %3317 = vmatpush1.bf16.msra.mxu0 %v3246
        %3318 = vmatprep.subr.bf16.mxu0 0
        %3319 = vmatpush1.bf16.msra.mxu0 %v3247
        %3320 = vmatprep.subr.bf16.mxu0 0
        %3321 = vmatpush1.bf16.msra.mxu0 %v3248
        %3322 = vmatprep.subr.bf16.mxu0 0
        %3323 = vmatpush1.bf16.msra.mxu0 %v3249
        %3324 = vmatprep.subr.bf16.mxu0 0
        %3325 = vmatpush1.bf16.msra.mxu0 %v3250
        %3326 = vmatprep.subr.bf16.mxu0 0
        %3327 = vmatpush1.bf16.msra.mxu0 %v3251
        %3328 = vmatprep.subr.bf16.mxu0 0
        %3329 = vmatpush1.bf16.msra.mxu0 %v3252
        %3330 = vmatprep.subr.bf16.mxu0 0
        %3331 = vmatpush1.bf16.msra.mxu0 %v3253
        %3332 = vmatprep.subr.bf16.mxu0 0
        %3333 = vmatpush1.bf16.msra.mxu0 %v3254
        %3334 = vmatprep.subr.bf16.mxu0 0
        %3335 = vmatpush1.bf16.msra.mxu0 %v3255
        %3336 = vmatprep.mubr.bf16.mxu0 %v3038
        %3337 = vmatmul.mubr.bf16.gmra.mrb[0].mxu0 %v3037
        %v3338 = vpop.f32.mrb[0].mxu0
        %v3339 = vadd.f32 %v3110, %v3338
        %v3340 = vpop.f32.mrb[0].mxu0
        %v3341 = vpop.f32.mrb[0].mxu0
        %v3342 = vadd.f32 %v3110, %v3341
        %v3343 = vpop.f32.mrb[0].mxu0
        %3344 = vdwg.mxu0
        %3345 = vmatprep.subr.bf16.mxu0 0
        %3346 = vmatpush1.bf16.msra.mxu0 %v3256
        %3347 = vmatprep.subr.bf16.mxu0 0
        %3348 = vmatpush1.bf16.msra.mxu0 %v3257
        %3349 = vmatprep.subr.bf16.mxu0 0
        %3350 = vmatpush1.bf16.msra.mxu0 %v3258
        %3351 = vmatprep.subr.bf16.mxu0 0
        %3352 = vmatpush1.bf16.msra.mxu0 %v3259
        %3353 = vmatprep.subr.bf16.mxu0 0
        %3354 = vmatpush1.bf16.msra.mxu0 %v3260
        %3355 = vmatprep.subr.bf16.mxu0 0
        %3356 = vmatpush1.bf16.msra.mxu0 %v3261
        %3357 = vmatprep.subr.bf16.mxu0 0
        %3358 = vmatpush1.bf16.msra.mxu0 %v3262
        %3359 = vmatprep.subr.bf16.mxu0 0
        %3360 = vmatpush1.bf16.msra.mxu0 %v3263
        %3361 = vmatprep.subr.bf16.mxu0 0
        %3362 = vmatpush1.bf16.msra.mxu0 %v3264
        %3363 = vmatprep.subr.bf16.mxu0 0
        %3364 = vmatpush1.bf16.msra.mxu0 %v3265
        %3365 = vmatprep.subr.bf16.mxu0 0
        %3366 = vmatpush1.bf16.msra.mxu0 %v3266
        %3367 = vmatprep.subr.bf16.mxu0 0
        %3368 = vmatpush1.bf16.msra.mxu0 %v3267
        %3369 = vmatprep.subr.bf16.mxu0 0
        %3370 = vmatpush1.bf16.msra.mxu0 %v3268
        %3371 = vmatprep.subr.bf16.mxu0 0
        %3372 = vmatpush1.bf16.msra.mxu0 %v3269
        %3373 = vmatprep.subr.bf16.mxu0 0
        %3374 = vmatpush1.bf16.msra.mxu0 %v3270
        %3375 = vmatprep.subr.bf16.mxu0 0
        %3376 = vmatpush1.bf16.msra.mxu0 %v3271
        %3377 = vmatprep.mubr.bf16.mxu0 %v3040
        %3378 = vmatmul.mubr.bf16.gmra.mrb[0].mxu0 %v3039
        %v3379 = vpop.f32.mrb[0].mxu0
        %v3380 = vadd.f32 %v3339, %v3379
        %v3381 = vpop.f32.mrb[0].mxu0
        %v3382 = vpop.f32.mrb[0].mxu0
        %v3383 = vadd.f32 %v3342, %v3382
        %v3384 = vpop.f32.mrb[0].mxu0
        %3385 = vdwg.mxu0
        %3386 = vmax.xlane.f32.xlu0 %v3380
        %v3387 = vpop.xlane.xlu0 %3386
        %3388 = vmax.xlane.f32.xlu0 %v3383
        %v3389 = vpop.xlane.xlu0 %3388
        %v3390 = vsub.f32 %v3380, %v3387
        %v3391 = vsub.f32 %v3383, %v3389
        %v3392 = vmul.f32 %v3390, 1.442695
        %v3393 = vpow.pop %v3392
        %v3394 = vmul.f32 %v3391, 1.442695
        %v3395 = vpow.pop %v3394
        %3396 = vadd.xlane.f32.xlu0 %v3393
        %v3397 = vpop.xlane.xlu0 %3396
        %3398 = vadd.xlane.f32.xlu0 %v3395
        %v3399 = vpop.xlane.xlu0 %3398
        %v3400 = vlog2.pop %v3397
        %v3401 = vmul.f32 %v3400, 0.6931472
        %v3402 = vlog2.pop %v3399
        %v3403 = vmul.f32 %v3402, 0.6931472
        %v3404 = vsub.f32 %v3390, %v3401
        %v3405 = vsub.f32 %v3391, %v3403
        %3406 = vst [vmem:[%s298] sm:$0xff] %v3404
        %3407 = vst [vmem:[%s298 + $0x8] sm:$0xff] %v3405
        %s3408 = smul.u32 2, %s19
        %p3409 = scmp.lt.s32.totalorder %s3408, 3
        %s3410 = scalar_select %p3409, %s3408, 3
        %s3411 = smul.addr %s3410, 8
        %s3412 = scalar_lea.vmem %s7, %s3411
        // Predicated region
        $region53: #{linear_mnist_forward.1} parent=47 // pred_check
          %p3413 = pneg %p189
        $region54: #{linear_mnist_forward.1} parent=47 // pred_check_branch
          %3415 = sbr.rel (%p3413) target = $region56
        $region55: #{linear_mnist_forward.1} parent=47 // pred_region
          %s3416 = smul.u32 2, %s19
        $region56: #{linear_mnist_forward.1} parent=47 // pred_fallthru
          _
      $region48: #{linear_mnist_forward.1} parent=5 // pred_fallthru
        _
      %p3417 = scmp.le.s32.totalorder 2, %s14
      // Predicated region
      $region57: #{linear_mnist_forward.1} parent=5 // pred_check
        %p3418 = pneg %p3417
      $region58: #{linear_mnist_forward.1} parent=5 // pred_check_branch
        %3420 = sbr.rel (%p3418) target = $region60
      $region59: #{linear_mnist_forward.1} parent=5 // pred_region
        %s3421 = ssub.s32 %s14, 2
        // Predicated region
        $region61: #{linear_mnist_forward.1} parent=59 // pred_check
          %p3422 = pneg %p195
        $region62: #{linear_mnist_forward.1} parent=59 // pred_check_branch
          %3424 = sbr.rel (%p3422) target = $region64
        $region63: #{linear_mnist_forward.1} parent=59 // pred_region
          %s3425 = smul.u32 2, %s20
          %p3426 = scmp.lt.s32.totalorder %s3425, 3
          %s3427 = scalar_select %p3426, %s3425, 3
          %s3428 = smul.addr %s3427, 8
          %s3429 = scalar_lea.vmem %s7, %s3428
        $region64: #{linear_mnist_forward.1} parent=59 // pred_fallthru
          _
      $region60: #{linear_mnist_forward.1} parent=5 // pred_fallthru
        _
    $region6: #{linear_mnist_forward.1} parent=1 // loop_footer
      %s18 = sadd.s32 1, %s14
    $region7: #{linear_mnist_forward.1} parent=1 // loop_footer_branch
      %13 = sbr.rel target = $region3
    $region8: #{linear_mnist_forward.1} parent=1 // loop_exit
      _
    %3430 = vsyncpa [#allocation3], 1
    %s3431 = scalar_lea.sflag [#allocation3], 1
    %3432 = vsyncpa %s3431, 1

</llo_original>
